<compile_context>
chip_gen: v6e
topology: v6e:2x2x1
jax: 0.10.0
libtpu: 0.0.40
codegen_flags: <defaults>
</compile_context>

<pallas_src>
import jax
import jax.numpy as jnp
import numpy as np
from jax import lax
from jax.experimental import pallas as pl
from jax.experimental.pallas import tpu as pltpu

# Set to jnp.bfloat16 in production (review: ~3x fewer MXU passes on v5e/v6e/v7x);
# kept f32 here so the strict 1e-3 check against the f32 reference holds.
MXU_IN_DTYPE = jnp.float32


def _dw_conv3x3_flat(x, wdw, H, W):
    """Depthwise 3x3 conv (stride 1, zero-pad 1) on a (Bt, C, H*W) lane-flat tile.

    Every tap is a static lane-shifted view of a zero-padded copy of the flat
    spatial axis: out-of-image rows fall into the zero padding, column wrap is
    masked.  One lane-aligned concat + 8 static slices -- no halo scratch, no
    per-step memset, no sublane-crossing slice copies.
    """
    Bt, C, HW = x.shape
    pad = ((W + 1 + 127) // 128) * 128            # >= W+1 and a multiple of 128
    zeros = jnp.zeros((Bt, C, pad), jnp.float32)  # -> lane-aligned concat below
    xp = jnp.concatenate([zeros, x, zeros], axis=2)        # (Bt, C, HW + 2*pad)

    wpos = lax.broadcasted_iota(jnp.int32, (1, 1, HW), 2) % W
    col_ok = {-1: wpos >= 1, 0: None, 1: wpos < (W - 1)}

    acc = x * wdw[4]                              # center tap: no shift, no mask
    for k in range(9):
        if k == 4:
            continue
        di, dj = k // 3 - 1, k % 3 - 1
        d = di * W + dj
        tap = xp[:, :, pad + d: pad + d + HW]     # value at spatial (h+di, w+dj)
        mask = col_ok[dj]
        if mask is not None:                      # zero the column wrap-around
            tap = jnp.where(mask, tap, 0.0)
        acc = acc + tap * wdw[k]
    return acc


def _make_cocs_kernel(H, W, n_total, eps=1e-5):
    def kernel(x_ref, wdw_ref, gamma_ref, beta_ref, wpw_ref,
               wfc1_ref, wfc2_ref, wsab_ref, o_ref, sum_ref, sumsq_ref):
        p = pl.program_id(0)          # 0: accumulate BN stats, 1: produce output
        b = pl.program_id(1)          # batch-tile index

        Bt = x_ref.shape[0]
        x = x_ref[...].astype(jnp.float32)                       # (Bt, C, HW)
        dw = _dw_conv3x3_flat(x, wdw_ref[...].astype(jnp.float32), H, W)

        @pl.when(p == 0)
        def _stats():
            @pl.when(b == 0)
            def _init():
                sum_ref[...] = jnp.zeros_like(sum_ref)
                sumsq_ref[...] = jnp.zeros_like(sumsq_ref)
            # One-pass E[x^2] - mean^2 in f32 (fine for the roughly zero-centered
            # conv output; switch to a compensated / two-pass form if data with
            # |mean| >> std is expected).
            sum_ref[...] += jnp.sum(jnp.sum(dw, axis=2, keepdims=True), axis=0)
            sumsq_ref[...] += jnp.sum(jnp.sum(dw * dw, axis=2, keepdims=True), axis=0)

        @pl.when(p == 1)
        def _main():
            # Fold global training-mode BN stats into one (C, 1) scale/shift.
            inv_n = 1.0 / n_total
            mean = sum_ref[...] * inv_n
            var = jnp.maximum(sumsq_ref[...] * inv_n - mean * mean, 0.0)
            scale = gamma_ref[...] * lax.rsqrt(var + eps)
            shift = beta_ref[...] - mean * scale

            y = jnp.maximum(dw * scale + shift, 0.0)             # (Bt, C, HW)

            wpw = wpw_ref[...].astype(MXU_IN_DTYPE)              # (Cout, Cin)
            wfc1 = wfc1_ref[...].astype(jnp.float32)             # (R, C)
            wfc2 = wfc2_ref[...].astype(jnp.float32)             # (C, R)
            wsab = wsab_ref[...].astype(jnp.float32)             # (2, 1)

            for i in range(Bt):       # static unroll; Bt is small here.
                # 1x1 pointwise conv on the MXU: (C, C) @ (C, HW).
                pw = jnp.dot(wpw, y[i].astype(MXU_IN_DTYPE),
                             preferred_element_type=jnp.float32)
                x1 = pw + x[i]                                   # residual

                # CAB: global avg/max pool -> shared 1x1-conv MLP -> sigmoid.
                pooled = jnp.concatenate(
                    [jnp.mean(x1, axis=1, keepdims=True),
                     jnp.max(x1, axis=1, keepdims=True)], axis=1)          # (C, 2)
                h = jnp.maximum(
                    jnp.dot(wfc1, pooled, preferred_element_type=jnp.float32),
                    0.0)                                                   # (R, 2)
                z = jnp.dot(wfc2, h, preferred_element_type=jnp.float32)   # (C, 2)
                cab = jax.nn.sigmoid(z[:, 0:1] + z[:, 1:2])                # (C, 1)

                # SAB on the 1x1-spatial CAB map: a 7x7 conv with padding=3 over
                # a 1x1 map reduces to its two center taps.
                st = jnp.concatenate([jnp.mean(cab, axis=0, keepdims=True),
                                      jnp.max(cab, axis=0, keepdims=True)],
                                     axis=0)                               # (2, 1)
                sab = jax.nn.sigmoid(
                    jnp.sum(st * wsab, axis=0, keepdims=True))             # (1, 1)

                # Lane-dense (H*W = 256 lanes) unmasked store.
                o_ref[i] = (x1 + sab).astype(o_ref.dtype)
    return kernel


def cocs_forward(x_nchw, params, *, batch_tile=None):
    """Pallas COCS forward. Input/output are NCHW (matches PyTorch)."""
    B, C, H, W = x_nchw.shape
    HW = H * W
    x = x_nchw.reshape(B, C, HW).astype(jnp.float32)   # free reshape, no HBM transpose

    wdw = params["w_dw"].reshape(C, 9).T.reshape(9, C, 1).astype(jnp.float32)
    gamma = params["bn_gamma"].reshape(C, 1).astype(jnp.float32)
    beta = params["bn_beta"].reshape(C, 1).astype(jnp.float32)
    wpw = params["w_pw"][:, :, 0, 0].astype(jnp.float32)       # (Cout, Cin)
    wfc1 = params["w_fc1"][:, :, 0, 0].astype(jnp.float32)     # (R, C)
    wfc2 = params["w_fc2"][:, :, 0, 0].astype(jnp.float32)     # (C, R)
    wsab = params["w_sab"][0, :, 3, 3].reshape(2, 1).astype(jnp.float32)
    R = wfc1.shape[0]

    # Whole batch per grid step at these sizes (amortizes per-step overhead);
    # pick a smaller tile for large B so (Bt, C, HW) stays well inside VMEM
    # (remember v7x only has 64 MiB physical).
    Bt = B if batch_tile is None else batch_tile
    assert B % Bt == 0
    NB = B // Bt

    kernel = _make_cocs_kernel(H, W, n_total=float(B * H * W))
    bhwc = B * HW * C

    out = pl.pallas_call(
        kernel,
        out_shape=jax.ShapeDtypeStruct((B, C, HW), jnp.float32),
        grid=(2, NB),                           # (phase, batch tile); phase 0 = stats
        in_specs=[
            pl.BlockSpec((Bt, C, HW), lambda p, b: (b, 0, 0)),
            pl.BlockSpec((9, C, 1), lambda p, b: (0, 0, 0)),
            pl.BlockSpec((C, 1), lambda p, b: (0, 0)),
            pl.BlockSpec((C, 1), lambda p, b: (0, 0)),
            pl.BlockSpec((C, C), lambda p, b: (0, 0)),
            pl.BlockSpec((R, C), lambda p, b: (0, 0)),
            pl.BlockSpec((C, R), lambda p, b: (0, 0)),
            pl.BlockSpec((2, 1), lambda p, b: (0, 0)),
        ],
        # b*p keeps the output block index constant through phase 0, so no
        # garbage writeback happens before phase 1 fills the block.
        out_specs=pl.BlockSpec((Bt, C, HW), lambda p, b: (b * p, 0, 0)),
        scratch_shapes=[pltpu.VMEM((C, 1), jnp.float32),       # per-channel sum
                        pltpu.VMEM((C, 1), jnp.float32)],      # per-channel sum of squares
        compiler_params=pltpu.CompilerParams(
            # Both axes MUST stay "arbitrary": BN stats accumulate across the
            # batch axis and the phase axis orders stats before their use.
            dimension_semantics=("arbitrary", "arbitrary"),
            vmem_limit_bytes=32 * 1024 * 1024),
        cost_estimate=pl.CostEstimate(
            flops=int(bhwc * (34 + 2 * C + 10)),
            transcendentals=int(B * (C + 3) + C),
            bytes_accessed=int(4 * (3 * bhwc + C * C + 15 * C))),
    )(x, wdw, gamma, beta, wpw, wfc1, wfc2, wsab)

    return out.reshape(B, C, H, W)               # free reshape back to NCHW


def cocs_reference(x, params):
    """Pure-JAX (XLA conv) reference of the PyTorch forward, NCHW."""
    B, C, H, W = x.shape
    dn = ("NCHW", "OIHW", "NCHW")
    u = lax.conv_general_dilated(x, params["w_dw"], (1, 1), ((1, 1), (1, 1)),
                                 feature_group_count=C, dimension_numbers=dn)
    mean = jnp.mean(u, axis=(0, 2, 3), keepdims=True)
    var = jnp.mean((u - mean) ** 2, axis=(0, 2, 3), keepdims=True)
    u = (u - mean) / jnp.sqrt(var + 1e-5)
    u = u * params["bn_gamma"].reshape(1, C, 1, 1) + params["bn_beta"].reshape(1, C, 1, 1)
    u = jnp.maximum(u, 0.0)
    u = lax.conv_general_dilated(u, params["w_pw"], (1, 1), ((0, 0), (0, 0)),
                                 dimension_numbers=dn)
    x1 = u + x
    avg = jnp.mean(x1, axis=(2, 3), keepdims=True)
    mx = jnp.max(x1, axis=(2, 3), keepdims=True)

    def mlp(v):
        h = lax.conv_general_dilated(v, params["w_fc1"], (1, 1), ((0, 0), (0, 0)),
                                     dimension_numbers=dn)
        h = jnp.maximum(h, 0.0)
        return lax.conv_general_dilated(h, params["w_fc2"], (1, 1), ((0, 0), (0, 0)),
                                        dimension_numbers=dn)

    cab = jax.nn.sigmoid(mlp(avg) + mlp(mx))               # (B, C, 1, 1)
    s_avg = jnp.mean(cab, axis=1, keepdims=True)
    s_max = jnp.max(cab, axis=1, keepdims=True)
    s = jnp.concatenate([s_avg, s_max], axis=1)            # (B, 2, 1, 1)
    s = lax.conv_general_dilated(s, params["w_sab"], (1, 1), ((3, 3), (3, 3)),
                                 dimension_numbers=dn)
    return x1 + jax.nn.sigmoid(s)


if __name__ == "__main__":
    B, C, H, W = 2, 32, 16, 16
    ratio = 16 if C >= 16 else C
    R = C // ratio

    key = jax.random.PRNGKey(0)
    ks = jax.random.split(key, 6)
    params = {
        "w_dw":    0.1 * jax.random.normal(ks[0], (C, 1, 3, 3), jnp.float32),
        "bn_gamma": jnp.ones((C,), jnp.float32),   # BatchNorm2d default init
        "bn_beta":  jnp.zeros((C,), jnp.float32),
        "w_pw":    0.1 * jax.random.normal(ks[1], (C, C, 1, 1), jnp.float32),
        "w_fc1":  0.02 * jax.random.normal(ks[2], (R, C, 1, 1), jnp.float32),
        "w_fc2":  0.02 * jax.random.normal(ks[3], (C, R, 1, 1), jnp.float32),
        "w_sab":  0.02 * jax.random.normal(ks[4], (1, 2, 7, 7), jnp.float32),
    }
    x = jax.random.normal(ks[5], (B, C, H, W), jnp.float32)

    out = jax.block_until_ready(cocs_forward(x, params))
    ref = jax.block_until_ready(cocs_reference(x, params))

    assert out.shape == x.shape
    np.testing.assert_allclose(np.asarray(out), np.asarray(ref),
                               rtol=1e-3, atol=1e-3)
    print("KERNEL_OK")
</pallas_src>

<mosaic_0001>
module attributes {stable_mosaic.version = 11 : i64} {
  func.func @kernel(%arg0: i32, %arg1: i32, %arg2: memref<2x32x256xf32, #tpu.memory_space<vmem>>, %arg3: memref<9x32x1xf32, #tpu.memory_space<vmem>>, %arg4: memref<32x1xf32, #tpu.memory_space<vmem>>, %arg5: memref<32x1xf32, #tpu.memory_space<vmem>>, %arg6: memref<32x32xf32, #tpu.memory_space<vmem>>, %arg7: memref<2x32xf32, #tpu.memory_space<vmem>>, %arg8: memref<32x2xf32, #tpu.memory_space<vmem>>, %arg9: memref<2x1xf32, #tpu.memory_space<vmem>>, %arg10: memref<2x32x256xf32, #tpu.memory_space<vmem>>, %arg11: memref<32x1xf32, #tpu.memory_space<vmem>>, %arg12: memref<32x1xf32, #tpu.memory_space<vmem>>) attributes {dimension_semantics = [#tpu.dimension_semantics<arbitrary>, #tpu.dimension_semantics<arbitrary>], iteration_bounds = array<i64: 2, 1>, scalar_prefetch = 0 : i64, scratch_operands = 2 : i64, tpu.core_type = #tpu.core_type<tc>, window_params = [{transform_indices = @transform_0, window_bounds = array<i64: 2, 32, 256>}, {pipeline_mode = #tpu.pipeline_mode<synchronous>, transform_indices = @transform_1, window_bounds = array<i64: 9, 32, 1>}, {pipeline_mode = #tpu.pipeline_mode<synchronous>, transform_indices = @transform_2, window_bounds = array<i64: 32, 1>}, {pipeline_mode = #tpu.pipeline_mode<synchronous>, transform_indices = @transform_3, window_bounds = array<i64: 32, 1>}, {pipeline_mode = #tpu.pipeline_mode<synchronous>, transform_indices = @transform_4, window_bounds = array<i64: 32, 32>}, {pipeline_mode = #tpu.pipeline_mode<synchronous>, transform_indices = @transform_5, window_bounds = array<i64: 2, 32>}, {pipeline_mode = #tpu.pipeline_mode<synchronous>, transform_indices = @transform_6, window_bounds = array<i64: 32, 2>}, {pipeline_mode = #tpu.pipeline_mode<synchronous>, transform_indices = @transform_7, window_bounds = array<i64: 2, 1>}, {transform_indices = @transform_8, window_bounds = array<i64: 2, 32, 256>}]} {
    %c0 = arith.constant 0 : index
    %c0_0 = arith.constant 0 : index
    %c0_1 = arith.constant 0 : index
    %0 = vector.load %arg2[%c0, %c0_0, %c0_1] : memref<2x32x256xf32, #tpu.memory_space<vmem>>, vector<2x32x256xf32>
    %c0_2 = arith.constant 0 : index
    %c0_3 = arith.constant 0 : index
    %c0_4 = arith.constant 0 : index
    %1 = vector.load %arg3[%c0_2, %c0_3, %c0_4] : memref<9x32x1xf32, #tpu.memory_space<vmem>>, vector<9x32x1xf32>
    %cst = arith.constant 0.000000e+00 : f32
    %2 = vector.broadcast %cst : f32 to vector<2x32x128xf32>
    %3 = tpu.concatenate %2, %0, %2 in 2 : vector<2x32x128xf32>, vector<2x32x256xf32>, vector<2x32x128xf32> -> vector<2x32x512xf32>
    %4 = tpu.iota {dimensions = array<i32: 2>} : vector<1x1x256xi32>
    %c16_i32 = arith.constant 16 : i32
    %c0_i32 = arith.constant 0 : i32
    %5 = arith.cmpi eq, %c16_i32, %c0_i32 : i32
    %c1_i32 = arith.constant 1 : i32
    %6 = arith.select %5, %c1_i32, %c16_i32 : i32
    %7 = vector.broadcast %6 : i32 to vector<1x1x256xi32>
    %8 = arith.remsi %4, %7 : vector<1x1x256xi32>
    %c0_i32_5 = arith.constant 0 : i32
    %9 = vector.broadcast %c0_i32_5 : i32 to vector<1x1x256xi32>
    %10 = arith.cmpi ne, %8, %9 : vector<1x1x256xi32>
    %c0_i32_6 = arith.constant 0 : i32
    %11 = vector.broadcast %c0_i32_6 : i32 to vector<1x1x256xi32>
    %12 = arith.cmpi slt, %8, %11 : vector<1x1x256xi32>
    %c0_i32_7 = arith.constant 0 : i32
    %13 = arith.cmpi slt, %6, %c0_i32_7 : i32
    %14 = vector.broadcast %13 : i1 to vector<1x1x256xi1>
    %15 = vector.broadcast %14 : vector<1x1x256xi1> to vector<1x1x256xi1>
    %16 = arith.xori %12, %15 : vector<1x1x256xi1>
    %17 = arith.andi %16, %10 : vector<1x1x256xi1>
    %18 = vector.broadcast %6 : i32 to vector<1x1x256xi32>
    %19 = arith.addi %8, %18 : vector<1x1x256xi32>
    %20 = arith.select %17, %19, %8 : vector<1x1x256xi1>, vector<1x1x256xi32>
    %c1_i32_8 = arith.constant 1 : i32
    %21 = vector.broadcast %c1_i32_8 : i32 to vector<1x1x256xi32>
    %22 = arith.cmpi sge, %20, %21 : vector<1x1x256xi32>
    %c15_i32 = arith.constant 15 : i32
    %23 = vector.broadcast %c15_i32 : i32 to vector<1x1x256xi32>
    %24 = arith.cmpi slt, %20, %23 : vector<1x1x256xi32>
    %25 = vector.extract_strided_slice %1 {offsets = [4, 0, 0], sizes = [1, 32, 1], strides = [1, 1, 1]} : vector<9x32x1xf32> to vector<1x32x1xf32>
    %26 = vector.shape_cast %25 : vector<1x32x1xf32> to vector<32x1xf32>
    %27 = vector.shape_cast %26 : vector<32x1xf32> to vector<1x32x1xf32>
    %28 = vector.broadcast %27 : vector<1x32x1xf32> to vector<2x32x256xf32>
    %29 = arith.mulf %0, %28 : vector<2x32x256xf32>
    %30 = vector.extract_strided_slice %3 {offsets = [0, 0, 111], sizes = [2, 32, 256], strides = [1, 1, 1]} : vector<2x32x512xf32> to vector<2x32x256xf32>
    %cst_9 = arith.constant 0.000000e+00 : f32
    %31 = vector.shape_cast %22 : vector<1x1x256xi1> to vector<1x1x256xi1>
    %32 = vector.broadcast %31 : vector<1x1x256xi1> to vector<2x32x256xi1>
    %33 = vector.broadcast %cst_9 : f32 to vector<2x32x256xf32>
    %34 = arith.select %32, %30, %33 : vector<2x32x256xi1>, vector<2x32x256xf32>
    %35 = vector.extract_strided_slice %1 {offsets = [0, 0, 0], sizes = [1, 32, 1], strides = [1, 1, 1]} : vector<9x32x1xf32> to vector<1x32x1xf32>
    %36 = vector.shape_cast %35 : vector<1x32x1xf32> to vector<32x1xf32>
    %37 = vector.shape_cast %36 : vector<32x1xf32> to vector<1x32x1xf32>
    %38 = vector.broadcast %37 : vector<1x32x1xf32> to vector<2x32x256xf32>
    %39 = arith.mulf %34, %38 : vector<2x32x256xf32>
    %40 = arith.addf %29, %39 : vector<2x32x256xf32>
    %41 = vector.extract_strided_slice %3 {offsets = [0, 0, 112], sizes = [2, 32, 256], strides = [1, 1, 1]} : vector<2x32x512xf32> to vector<2x32x256xf32>
    %42 = vector.extract_strided_slice %1 {offsets = [1, 0, 0], sizes = [1, 32, 1], strides = [1, 1, 1]} : vector<9x32x1xf32> to vector<1x32x1xf32>
    %43 = vector.shape_cast %42 : vector<1x32x1xf32> to vector<32x1xf32>
    %44 = vector.shape_cast %43 : vector<32x1xf32> to vector<1x32x1xf32>
    %45 = vector.broadcast %44 : vector<1x32x1xf32> to vector<2x32x256xf32>
    %46 = arith.mulf %41, %45 : vector<2x32x256xf32>
    %47 = arith.addf %40, %46 : vector<2x32x256xf32>
    %48 = vector.extract_strided_slice %3 {offsets = [0, 0, 113], sizes = [2, 32, 256], strides = [1, 1, 1]} : vector<2x32x512xf32> to vector<2x32x256xf32>
    %cst_10 = arith.constant 0.000000e+00 : f32
    %49 = vector.shape_cast %24 : vector<1x1x256xi1> to vector<1x1x256xi1>
    %50 = vector.broadcast %49 : vector<1x1x256xi1> to vector<2x32x256xi1>
    %51 = vector.broadcast %cst_10 : f32 to vector<2x32x256xf32>
    %52 = arith.select %50, %48, %51 : vector<2x32x256xi1>, vector<2x32x256xf32>
    %53 = vector.extract_strided_slice %1 {offsets = [2, 0, 0], sizes = [1, 32, 1], strides = [1, 1, 1]} : vector<9x32x1xf32> to vector<1x32x1xf32>
    %54 = vector.shape_cast %53 : vector<1x32x1xf32> to vector<32x1xf32>
    %55 = vector.shape_cast %54 : vector<32x1xf32> to vector<1x32x1xf32>
    %56 = vector.broadcast %55 : vector<1x32x1xf32> to vector<2x32x256xf32>
    %57 = arith.mulf %52, %56 : vector<2x32x256xf32>
    %58 = arith.addf %47, %57 : vector<2x32x256xf32>
    %59 = vector.extract_strided_slice %3 {offsets = [0, 0, 127], sizes = [2, 32, 256], strides = [1, 1, 1]} : vector<2x32x512xf32> to vector<2x32x256xf32>
    %cst_11 = arith.constant 0.000000e+00 : f32
    %60 = vector.shape_cast %22 : vector<1x1x256xi1> to vector<1x1x256xi1>
    %61 = vector.broadcast %60 : vector<1x1x256xi1> to vector<2x32x256xi1>
    %62 = vector.broadcast %cst_11 : f32 to vector<2x32x256xf32>
    %63 = arith.select %61, %59, %62 : vector<2x32x256xi1>, vector<2x32x256xf32>
    %64 = vector.extract_strided_slice %1 {offsets = [3, 0, 0], sizes = [1, 32, 1], strides = [1, 1, 1]} : vector<9x32x1xf32> to vector<1x32x1xf32>
    %65 = vector.shape_cast %64 : vector<1x32x1xf32> to vector<32x1xf32>
    %66 = vector.shape_cast %65 : vector<32x1xf32> to vector<1x32x1xf32>
    %67 = vector.broadcast %66 : vector<1x32x1xf32> to vector<2x32x256xf32>
    %68 = arith.mulf %63, %67 : vector<2x32x256xf32>
    %69 = arith.addf %58, %68 : vector<2x32x256xf32>
    %70 = vector.extract_strided_slice %3 {offsets = [0, 0, 129], sizes = [2, 32, 256], strides = [1, 1, 1]} : vector<2x32x512xf32> to vector<2x32x256xf32>
    %cst_12 = arith.constant 0.000000e+00 : f32
    %71 = vector.shape_cast %24 : vector<1x1x256xi1> to vector<1x1x256xi1>
    %72 = vector.broadcast %71 : vector<1x1x256xi1> to vector<2x32x256xi1>
    %73 = vector.broadcast %cst_12 : f32 to vector<2x32x256xf32>
    %74 = arith.select %72, %70, %73 : vector<2x32x256xi1>, vector<2x32x256xf32>
    %75 = vector.extract_strided_slice %1 {offsets = [5, 0, 0], sizes = [1, 32, 1], strides = [1, 1, 1]} : vector<9x32x1xf32> to vector<1x32x1xf32>
    %76 = vector.shape_cast %75 : vector<1x32x1xf32> to vector<32x1xf32>
    %77 = vector.shape_cast %76 : vector<32x1xf32> to vector<1x32x1xf32>
    %78 = vector.broadcast %77 : vector<1x32x1xf32> to vector<2x32x256xf32>
    %79 = arith.mulf %74, %78 : vector<2x32x256xf32>
    %80 = arith.addf %69, %79 : vector<2x32x256xf32>
    %81 = vector.extract_strided_slice %3 {offsets = [0, 0, 143], sizes = [2, 32, 256], strides = [1, 1, 1]} : vector<2x32x512xf32> to vector<2x32x256xf32>
    %cst_13 = arith.constant 0.000000e+00 : f32
    %82 = vector.shape_cast %22 : vector<1x1x256xi1> to vector<1x1x256xi1>
    %83 = vector.broadcast %82 : vector<1x1x256xi1> to vector<2x32x256xi1>
    %84 = vector.broadcast %cst_13 : f32 to vector<2x32x256xf32>
    %85 = arith.select %83, %81, %84 : vector<2x32x256xi1>, vector<2x32x256xf32>
    %86 = vector.extract_strided_slice %1 {offsets = [6, 0, 0], sizes = [1, 32, 1], strides = [1, 1, 1]} : vector<9x32x1xf32> to vector<1x32x1xf32>
    %87 = vector.shape_cast %86 : vector<1x32x1xf32> to vector<32x1xf32>
    %88 = vector.shape_cast %87 : vector<32x1xf32> to vector<1x32x1xf32>
    %89 = vector.broadcast %88 : vector<1x32x1xf32> to vector<2x32x256xf32>
    %90 = arith.mulf %85, %89 : vector<2x32x256xf32>
    %91 = arith.addf %80, %90 : vector<2x32x256xf32>
    %92 = vector.extract_strided_slice %3 {offsets = [0, 0, 144], sizes = [2, 32, 256], strides = [1, 1, 1]} : vector<2x32x512xf32> to vector<2x32x256xf32>
    %93 = vector.extract_strided_slice %1 {offsets = [7, 0, 0], sizes = [1, 32, 1], strides = [1, 1, 1]} : vector<9x32x1xf32> to vector<1x32x1xf32>
    %94 = vector.shape_cast %93 : vector<1x32x1xf32> to vector<32x1xf32>
    %95 = vector.shape_cast %94 : vector<32x1xf32> to vector<1x32x1xf32>
    %96 = vector.broadcast %95 : vector<1x32x1xf32> to vector<2x32x256xf32>
    %97 = arith.mulf %92, %96 : vector<2x32x256xf32>
    %98 = arith.addf %91, %97 : vector<2x32x256xf32>
    %99 = vector.extract_strided_slice %3 {offsets = [0, 0, 145], sizes = [2, 32, 256], strides = [1, 1, 1]} : vector<2x32x512xf32> to vector<2x32x256xf32>
    %cst_14 = arith.constant 0.000000e+00 : f32
    %100 = vector.shape_cast %24 : vector<1x1x256xi1> to vector<1x1x256xi1>
    %101 = vector.broadcast %100 : vector<1x1x256xi1> to vector<2x32x256xi1>
    %102 = vector.broadcast %cst_14 : f32 to vector<2x32x256xf32>
    %103 = arith.select %101, %99, %102 : vector<2x32x256xi1>, vector<2x32x256xf32>
    %104 = vector.extract_strided_slice %1 {offsets = [8, 0, 0], sizes = [1, 32, 1], strides = [1, 1, 1]} : vector<9x32x1xf32> to vector<1x32x1xf32>
    %105 = vector.shape_cast %104 : vector<1x32x1xf32> to vector<32x1xf32>
    %106 = vector.shape_cast %105 : vector<32x1xf32> to vector<1x32x1xf32>
    %107 = vector.broadcast %106 : vector<1x32x1xf32> to vector<2x32x256xf32>
    %108 = arith.mulf %103, %107 : vector<2x32x256xf32>
    %109 = arith.addf %98, %108 : vector<2x32x256xf32>
    %c0_i32_15 = arith.constant 0 : i32
    %110 = arith.cmpi eq, %arg0, %c0_i32_15 : i32
    %111 = arith.extui %110 : i1 to i32
    %c0_i32_16 = arith.constant 0 : i32
    %112 = arith.cmpi ne, %111, %c0_i32_16 : i32
    scf.if %112 {
      %c0_i32_19 = arith.constant 0 : i32
      %116 = arith.cmpi eq, %arg1, %c0_i32_19 : i32
      %117 = arith.extui %116 : i1 to i32
      %c0_i32_20 = arith.constant 0 : i32
      %118 = arith.cmpi ne, %117, %c0_i32_20 : i32
      scf.if %118 {
        %cst_33 = arith.constant 0.000000e+00 : f32
        %132 = vector.broadcast %cst_33 : f32 to vector<32x1xf32>
        %c0_34 = arith.constant 0 : index
        %c0_35 = arith.constant 0 : index
        %133 = vector.load %arg11[%c0_34, %c0_35] : memref<32x1xf32, #tpu.memory_space<vmem>>, vector<32x1xf32>
        tpu.vector_store %arg11[%c0_34, %c0_35], %132 {strides = array<i32>} : memref<32x1xf32, #tpu.memory_space<vmem>>, vector<32x1xf32>,
        %cst_36 = arith.constant 0.000000e+00 : f32
        %134 = vector.broadcast %cst_36 : f32 to vector<32x1xf32>
        %c0_37 = arith.constant 0 : index
        %c0_38 = arith.constant 0 : index
        %135 = vector.load %arg12[%c0_37, %c0_38] : memref<32x1xf32, #tpu.memory_space<vmem>>, vector<32x1xf32>
        tpu.vector_store %arg12[%c0_37, %c0_38], %134 {strides = array<i32>} : memref<32x1xf32, #tpu.memory_space<vmem>>, vector<32x1xf32>,
      } else {
      }
      %c0_21 = arith.constant 0 : index
      %c0_22 = arith.constant 0 : index
      %119 = vector.load %arg11[%c0_21, %c0_22] : memref<32x1xf32, #tpu.memory_space<vmem>>, vector<32x1xf32>
      %cst_23 = arith.constant dense<0.000000e+00> : vector<2x32xf32>
      %120 = vector.multi_reduction <add>, %109, %cst_23 [2] : vector<2x32x256xf32> to vector<2x32xf32>
      %121 = vector.shape_cast %120 : vector<2x32xf32> to vector<2x32x1xf32>
      %cst_24 = arith.constant dense<0.000000e+00> : vector<32x1xf32>
      %122 = vector.multi_reduction <add>, %121, %cst_24 [0] : vector<2x32x1xf32> to vector<32x1xf32>
      %123 = arith.addf %119, %122 : vector<32x1xf32>
      %c0_25 = arith.constant 0 : index
      %c0_26 = arith.constant 0 : index
      %124 = vector.load %arg11[%c0_25, %c0_26] : memref<32x1xf32, #tpu.memory_space<vmem>>, vector<32x1xf32>
      tpu.vector_store %arg11[%c0_25, %c0_26], %123 {strides = array<i32>} : memref<32x1xf32, #tpu.memory_space<vmem>>, vector<32x1xf32>,
      %c0_27 = arith.constant 0 : index
      %c0_28 = arith.constant 0 : index
      %125 = vector.load %arg12[%c0_27, %c0_28] : memref<32x1xf32, #tpu.memory_space<vmem>>, vector<32x1xf32>
      %126 = arith.mulf %109, %109 : vector<2x32x256xf32>
      %cst_29 = arith.constant dense<0.000000e+00> : vector<2x32xf32>
      %127 = vector.multi_reduction <add>, %126, %cst_29 [2] : vector<2x32x256xf32> to vector<2x32xf32>
      %128 = vector.shape_cast %127 : vector<2x32xf32> to vector<2x32x1xf32>
      %cst_30 = arith.constant dense<0.000000e+00> : vector<32x1xf32>
      %129 = vector.multi_reduction <add>, %128, %cst_30 [0] : vector<2x32x1xf32> to vector<32x1xf32>
      %130 = arith.addf %125, %129 : vector<32x1xf32>
      %c0_31 = arith.constant 0 : index
      %c0_32 = arith.constant 0 : index
      %131 = vector.load %arg12[%c0_31, %c0_32] : memref<32x1xf32, #tpu.memory_space<vmem>>, vector<32x1xf32>
      tpu.vector_store %arg12[%c0_31, %c0_32], %130 {strides = array<i32>} : memref<32x1xf32, #tpu.memory_space<vmem>>, vector<32x1xf32>,
    } else {
    }
    %c1_i32_17 = arith.constant 1 : i32
    %113 = arith.cmpi eq, %arg0, %c1_i32_17 : i32
    %114 = arith.extui %113 : i1 to i32
    %c0_i32_18 = arith.constant 0 : i32
    %115 = arith.cmpi ne, %114, %c0_i32_18 : i32
    scf.if %115 {
      %c0_19 = arith.constant 0 : index
      %c0_20 = arith.constant 0 : index
      %116 = vector.load %arg11[%c0_19, %c0_20] : memref<32x1xf32, #tpu.memory_space<vmem>>, vector<32x1xf32>
      %cst_21 = arith.constant 0.001953125 : f32
      %117 = vector.broadcast %cst_21 : f32 to vector<32x1xf32>
      %118 = arith.mulf %116, %117 : vector<32x1xf32>
      %c0_22 = arith.constant 0 : index
      %c0_23 = arith.constant 0 : index
      %119 = vector.load %arg12[%c0_22, %c0_23] : memref<32x1xf32, #tpu.memory_space<vmem>>, vector<32x1xf32>
      %cst_24 = arith.constant 0.001953125 : f32
      %120 = vector.broadcast %cst_24 : f32 to vector<32x1xf32>
      %121 = arith.mulf %119, %120 : vector<32x1xf32>
      %122 = arith.mulf %118, %118 : vector<32x1xf32>
      %123 = arith.subf %121, %122 : vector<32x1xf32>
      %cst_25 = arith.constant 0.000000e+00 : f32
      %124 = vector.broadcast %cst_25 : f32 to vector<32x1xf32>
      %125 = arith.maximumf %123, %124 : vector<32x1xf32>
      %c0_26 = arith.constant 0 : index
      %c0_27 = arith.constant 0 : index
      %126 = vector.load %arg4[%c0_26, %c0_27] : memref<32x1xf32, #tpu.memory_space<vmem>>, vector<32x1xf32>
      %cst_28 = arith.constant 9.99999974E-6 : f32
      %127 = vector.broadcast %cst_28 : f32 to vector<32x1xf32>
      %128 = arith.addf %125, %127 : vector<32x1xf32>
      %129 = math.rsqrt %128 : vector<32x1xf32>
      %130 = arith.mulf %126, %129 : vector<32x1xf32>
      %c0_29 = arith.constant 0 : index
      %c0_30 = arith.constant 0 : index
      %131 = vector.load %arg5[%c0_29, %c0_30] : memref<32x1xf32, #tpu.memory_space<vmem>>, vector<32x1xf32>
      %132 = arith.mulf %118, %130 : vector<32x1xf32>
      %133 = arith.subf %131, %132 : vector<32x1xf32>
      %134 = vector.shape_cast %130 : vector<32x1xf32> to vector<1x32x1xf32>
      %135 = vector.broadcast %134 : vector<1x32x1xf32> to vector<2x32x256xf32>
      %136 = arith.mulf %109, %135 : vector<2x32x256xf32>
      %137 = vector.shape_cast %133 : vector<32x1xf32> to vector<1x32x1xf32>
      %138 = vector.broadcast %137 : vector<1x32x1xf32> to vector<2x32x256xf32>
      %139 = arith.addf %136, %138 : vector<2x32x256xf32>
      %cst_31 = arith.constant 0.000000e+00 : f32
      %140 = vector.broadcast %cst_31 : f32 to vector<2x32x256xf32>
      %141 = arith.maximumf %139, %140 : vector<2x32x256xf32>
      %c0_32 = arith.constant 0 : index
      %c0_33 = arith.constant 0 : index
      %142 = vector.load %arg6[%c0_32, %c0_33] : memref<32x32xf32, #tpu.memory_space<vmem>>, vector<32x32xf32>
      %c0_34 = arith.constant 0 : index
      %c0_35 = arith.constant 0 : index
      %143 = vector.load %arg7[%c0_34, %c0_35] : memref<2x32xf32, #tpu.memory_space<vmem>>, vector<2x32xf32>
      %c0_36 = arith.constant 0 : index
      %c0_37 = arith.constant 0 : index
      %144 = vector.load %arg8[%c0_36, %c0_37] : memref<32x2xf32, #tpu.memory_space<vmem>>, vector<32x2xf32>
      %c0_38 = arith.constant 0 : index
      %c0_39 = arith.constant 0 : index
      %145 = vector.load %arg9[%c0_38, %c0_39] : memref<2x1xf32, #tpu.memory_space<vmem>>, vector<2x1xf32>
      %146 = vector.extract_strided_slice %141 {offsets = [0, 0, 0], sizes = [1, 32, 256], strides = [1, 1, 1]} : vector<2x32x256xf32> to vector<1x32x256xf32>
      %147 = vector.shape_cast %146 : vector<1x32x256xf32> to vector<32x256xf32>
      %cst_40 = arith.constant dense<0.000000e+00> : vector<32x256xf32>
      %148 = tpu.matmul %142, %147, %cst_40 {dimension_numbers = #tpu.dot_dimension_numbers<[1], [0], [0], [1], [0, 0, 1, 1], [], []>} : vector<32x32xf32>, vector<32x256xf32>, vector<32x256xf32> -> vector<32x256xf32>
      %149 = vector.extract_strided_slice %0 {offsets = [0, 0, 0], sizes = [1, 32, 256], strides = [1, 1, 1]} : vector<2x32x256xf32> to vector<1x32x256xf32>
      %150 = vector.shape_cast %149 : vector<1x32x256xf32> to vector<32x256xf32>
      %151 = arith.addf %148, %150 : vector<32x256xf32>
      %cst_41 = arith.constant dense<0.000000e+00> : vector<32xf32>
      %152 = vector.multi_reduction <add>, %151, %cst_41 [1] : vector<32x256xf32> to vector<32xf32>
      %153 = vector.shape_cast %152 : vector<32xf32> to vector<32x1xf32>
      %cst_42 = arith.constant 2.560000e+02 : f32
      %154 = vector.broadcast %cst_42 : f32 to vector<32x1xf32>
      %155 = arith.divf %153, %154 : vector<32x1xf32>
      %cst_43 = arith.constant dense<0xFF800000> : vector<32xf32>
      %156 = vector.multi_reduction <maximumf>, %151, %cst_43 [1] : vector<32x256xf32> to vector<32xf32>
      %157 = vector.shape_cast %156 : vector<32xf32> to vector<32x1xf32>
      %158 = tpu.concatenate %155, %157 in 1 : vector<32x1xf32>, vector<32x1xf32> -> vector<32x2xf32>
      %cst_44 = arith.constant dense<0.000000e+00> : vector<2x2xf32>
      %159 = tpu.matmul %143, %158, %cst_44 {dimension_numbers = #tpu.dot_dimension_numbers<[1], [0], [0], [1], [0, 0, 1, 1], [], []>} : vector<2x32xf32>, vector<32x2xf32>, vector<2x2xf32> -> vector<2x2xf32>
      %cst_45 = arith.constant 0.000000e+00 : f32
      %160 = vector.broadcast %cst_45 : f32 to vector<2x2xf32>
      %161 = arith.maximumf %159, %160 : vector<2x2xf32>
      %cst_46 = arith.constant dense<0.000000e+00> : vector<32x2xf32>
      %162 = tpu.matmul %144, %161, %cst_46 {dimension_numbers = #tpu.dot_dimension_numbers<[1], [0], [0], [1], [0, 0, 1, 1], [], []>} : vector<32x2xf32>, vector<2x2xf32>, vector<32x2xf32> -> vector<32x2xf32>
      %163 = vector.extract_strided_slice %162 {offsets = [0, 0], sizes = [32, 1], strides = [1, 1]} : vector<32x2xf32> to vector<32x1xf32>
      %164 = vector.extract_strided_slice %162 {offsets = [0, 1], sizes = [32, 1], strides = [1, 1]} : vector<32x2xf32> to vector<32x1xf32>
      %165 = arith.addf %163, %164 : vector<32x1xf32>
      %166 = arith.negf %165 : vector<32x1xf32>
      %167 = math.exp %166 : vector<32x1xf32>
      %cst_47 = arith.constant 1.000000e+00 : f32
      %168 = vector.broadcast %cst_47 : f32 to vector<32x1xf32>
      %169 = arith.addf %168, %167 : vector<32x1xf32>
      %170 = arith.divf %168, %169 : vector<32x1xf32>
      %cst_48 = arith.constant dense<0.000000e+00> : vector<1xf32>
      %171 = vector.multi_reduction <add>, %170, %cst_48 [0] : vector<32x1xf32> to vector<1xf32>
      %172 = vector.shape_cast %171 : vector<1xf32> to vector<1x1xf32>
      %cst_49 = arith.constant 3.200000e+01 : f32
      %173 = vector.broadcast %cst_49 : f32 to vector<1x1xf32>
      %174 = arith.divf %172, %173 : vector<1x1xf32>
      %cst_50 = arith.constant dense<0xFF800000> : vector<1xf32>
      %175 = vector.multi_reduction <maximumf>, %170, %cst_50 [0] : vector<32x1xf32> to vector<1xf32>
      %176 = vector.shape_cast %175 : vector<1xf32> to vector<1x1xf32>
      %177 = tpu.concatenate %174, %176 in 0 : vector<1x1xf32>, vector<1x1xf32> -> vector<2x1xf32>
      %178 = arith.mulf %177, %145 : vector<2x1xf32>
      %cst_51 = arith.constant dense<0.000000e+00> : vector<1xf32>
      %179 = vector.multi_reduction <add>, %178, %cst_51 [0] : vector<2x1xf32> to vector<1xf32>
      %180 = vector.shape_cast %179 : vector<1xf32> to vector<1x1xf32>
      %181 = arith.negf %180 : vector<1x1xf32>
      %182 = math.exp %181 : vector<1x1xf32>
      %cst_52 = arith.constant 1.000000e+00 : f32
      %183 = vector.broadcast %cst_52 : f32 to vector<1x1xf32>
      %184 = arith.addf %183, %182 : vector<1x1xf32>
      %185 = arith.divf %183, %184 : vector<1x1xf32>
      %186 = vector.broadcast %185 : vector<1x1xf32> to vector<32x256xf32>
      %187 = arith.addf %151, %186 : vector<32x256xf32>
      %c0_53 = arith.constant 0 : index
      %c0_54 = arith.constant 0 : index
      %c0_55 = arith.constant 0 : index
      %188 = vector.load %arg10[%c0_53, %c0_54, %c0_55] : memref<2x32x256xf32, #tpu.memory_space<vmem>>, vector<1x32x256xf32>
      %189 = vector.shape_cast %188 : vector<1x32x256xf32> to vector<32x256xf32>
      %190 = vector.shape_cast %187 : vector<32x256xf32> to vector<1x32x256xf32>
      tpu.vector_store %arg10[%c0_53, %c0_54, %c0_55], %190 {strides = array<i32>} : memref<2x32x256xf32, #tpu.memory_space<vmem>>, vector<1x32x256xf32>,
      %191 = vector.extract_strided_slice %141 {offsets = [1, 0, 0], sizes = [1, 32, 256], strides = [1, 1, 1]} : vector<2x32x256xf32> to vector<1x32x256xf32>
      %192 = vector.shape_cast %191 : vector<1x32x256xf32> to vector<32x256xf32>
      %cst_56 = arith.constant dense<0.000000e+00> : vector<32x256xf32>
      %193 = tpu.matmul %142, %192, %cst_56 {dimension_numbers = #tpu.dot_dimension_numbers<[1], [0], [0], [1], [0, 0, 1, 1], [], []>} : vector<32x32xf32>, vector<32x256xf32>, vector<32x256xf32> -> vector<32x256xf32>
      %194 = vector.extract_strided_slice %0 {offsets = [1, 0, 0], sizes = [1, 32, 256], strides = [1, 1, 1]} : vector<2x32x256xf32> to vector<1x32x256xf32>
      %195 = vector.shape_cast %194 : vector<1x32x256xf32> to vector<32x256xf32>
      %196 = arith.addf %193, %195 : vector<32x256xf32>
      %cst_57 = arith.constant dense<0.000000e+00> : vector<32xf32>
      %197 = vector.multi_reduction <add>, %196, %cst_57 [1] : vector<32x256xf32> to vector<32xf32>
      %198 = vector.shape_cast %197 : vector<32xf32> to vector<32x1xf32>
      %cst_58 = arith.constant 2.560000e+02 : f32
      %199 = vector.broadcast %cst_58 : f32 to vector<32x1xf32>
      %200 = arith.divf %198, %199 : vector<32x1xf32>
      %cst_59 = arith.constant dense<0xFF800000> : vector<32xf32>
      %201 = vector.multi_reduction <maximumf>, %196, %cst_59 [1] : vector<32x256xf32> to vector<32xf32>
      %202 = vector.shape_cast %201 : vector<32xf32> to vector<32x1xf32>
      %203 = tpu.concatenate %200, %202 in 1 : vector<32x1xf32>, vector<32x1xf32> -> vector<32x2xf32>
      %cst_60 = arith.constant dense<0.000000e+00> : vector<2x2xf32>
      %204 = tpu.matmul %143, %203, %cst_60 {dimension_numbers = #tpu.dot_dimension_numbers<[1], [0], [0], [1], [0, 0, 1, 1], [], []>} : vector<2x32xf32>, vector<32x2xf32>, vector<2x2xf32> -> vector<2x2xf32>
      %cst_61 = arith.constant 0.000000e+00 : f32
      %205 = vector.broadcast %cst_61 : f32 to vector<2x2xf32>
      %206 = arith.maximumf %204, %205 : vector<2x2xf32>
      %cst_62 = arith.constant dense<0.000000e+00> : vector<32x2xf32>
      %207 = tpu.matmul %144, %206, %cst_62 {dimension_numbers = #tpu.dot_dimension_numbers<[1], [0], [0], [1], [0, 0, 1, 1], [], []>} : vector<32x2xf32>, vector<2x2xf32>, vector<32x2xf32> -> vector<32x2xf32>
      %208 = vector.extract_strided_slice %207 {offsets = [0, 0], sizes = [32, 1], strides = [1, 1]} : vector<32x2xf32> to vector<32x1xf32>
      %209 = vector.extract_strided_slice %207 {offsets = [0, 1], sizes = [32, 1], strides = [1, 1]} : vector<32x2xf32> to vector<32x1xf32>
      %210 = arith.addf %208, %209 : vector<32x1xf32>
      %211 = arith.negf %210 : vector<32x1xf32>
      %212 = math.exp %211 : vector<32x1xf32>
      %cst_63 = arith.constant 1.000000e+00 : f32
      %213 = vector.broadcast %cst_63 : f32 to vector<32x1xf32>
      %214 = arith.addf %213, %212 : vector<32x1xf32>
      %215 = arith.divf %213, %214 : vector<32x1xf32>
      %cst_64 = arith.constant dense<0.000000e+00> : vector<1xf32>
      %216 = vector.multi_reduction <add>, %215, %cst_64 [0] : vector<32x1xf32> to vector<1xf32>
      %217 = vector.shape_cast %216 : vector<1xf32> to vector<1x1xf32>
      %cst_65 = arith.constant 3.200000e+01 : f32
      %218 = vector.broadcast %cst_65 : f32 to vector<1x1xf32>
      %219 = arith.divf %217, %218 : vector<1x1xf32>
      %cst_66 = arith.constant dense<0xFF800000> : vector<1xf32>
      %220 = vector.multi_reduction <maximumf>, %215, %cst_66 [0] : vector<32x1xf32> to vector<1xf32>
      %221 = vector.shape_cast %220 : vector<1xf32> to vector<1x1xf32>
      %222 = tpu.concatenate %219, %221 in 0 : vector<1x1xf32>, vector<1x1xf32> -> vector<2x1xf32>
      %223 = arith.mulf %222, %145 : vector<2x1xf32>
      %cst_67 = arith.constant dense<0.000000e+00> : vector<1xf32>
      %224 = vector.multi_reduction <add>, %223, %cst_67 [0] : vector<2x1xf32> to vector<1xf32>
      %225 = vector.shape_cast %224 : vector<1xf32> to vector<1x1xf32>
      %226 = arith.negf %225 : vector<1x1xf32>
      %227 = math.exp %226 : vector<1x1xf32>
      %cst_68 = arith.constant 1.000000e+00 : f32
      %228 = vector.broadcast %cst_68 : f32 to vector<1x1xf32>
      %229 = arith.addf %228, %227 : vector<1x1xf32>
      %230 = arith.divf %228, %229 : vector<1x1xf32>
      %231 = vector.broadcast %230 : vector<1x1xf32> to vector<32x256xf32>
      %232 = arith.addf %196, %231 : vector<32x256xf32>
      %c1 = arith.constant 1 : index
      %c0_69 = arith.constant 0 : index
      %c0_70 = arith.constant 0 : index
      %233 = vector.load %arg10[%c1, %c0_69, %c0_70] : memref<2x32x256xf32, #tpu.memory_space<vmem>>, vector<1x32x256xf32>
      %234 = vector.shape_cast %233 : vector<1x32x256xf32> to vector<32x256xf32>
      %235 = vector.shape_cast %232 : vector<32x256xf32> to vector<1x32x256xf32>
      tpu.vector_store %arg10[%c1, %c0_69, %c0_70], %235 {strides = array<i32>} : memref<2x32x256xf32, #tpu.memory_space<vmem>>, vector<1x32x256xf32>,
    } else {
    }
    return
  }
  func.func @transform_0(%arg0: i32, %arg1: i32) -> (i32, i32, i32) {
    %c0_i32 = arith.constant 0 : i32
    %c0_i32_0 = arith.constant 0 : i32
    %c0_i32_1 = arith.constant 0 : i32
    return %arg1, %c0_i32, %c0_i32_0 : i32, i32, i32
  }
  func.func @transform_1(%arg0: i32, %arg1: i32) -> (i32, i32, i32) {
    %c0_i32 = arith.constant 0 : i32
    %c0_i32_0 = arith.constant 0 : i32
    %c0_i32_1 = arith.constant 0 : i32
    %c0_i32_2 = arith.constant 0 : i32
    return %c0_i32, %c0_i32_0, %c0_i32_1 : i32, i32, i32
  }
  func.func @transform_2(%arg0: i32, %arg1: i32) -> (i32, i32) {
    %c0_i32 = arith.constant 0 : i32
    %c0_i32_0 = arith.constant 0 : i32
    %c0_i32_1 = arith.constant 0 : i32
    return %c0_i32, %c0_i32_0 : i32, i32
  }
  func.func @transform_3(%arg0: i32, %arg1: i32) -> (i32, i32) {
    %c0_i32 = arith.constant 0 : i32
    %c0_i32_0 = arith.constant 0 : i32
    %c0_i32_1 = arith.constant 0 : i32
    return %c0_i32, %c0_i32_0 : i32, i32
  }
  func.func @transform_4(%arg0: i32, %arg1: i32) -> (i32, i32) {
    %c0_i32 = arith.constant 0 : i32
    %c0_i32_0 = arith.constant 0 : i32
    %c0_i32_1 = arith.constant 0 : i32
    return %c0_i32, %c0_i32_0 : i32, i32
  }
  func.func @transform_5(%arg0: i32, %arg1: i32) -> (i32, i32) {
    %c0_i32 = arith.constant 0 : i32
    %c0_i32_0 = arith.constant 0 : i32
    %c0_i32_1 = arith.constant 0 : i32
    return %c0_i32, %c0_i32_0 : i32, i32
  }
  func.func @transform_6(%arg0: i32, %arg1: i32) -> (i32, i32) {
    %c0_i32 = arith.constant 0 : i32
    %c0_i32_0 = arith.constant 0 : i32
    %c0_i32_1 = arith.constant 0 : i32
    return %c0_i32, %c0_i32_0 : i32, i32
  }
  func.func @transform_7(%arg0: i32, %arg1: i32) -> (i32, i32) {
    %c0_i32 = arith.constant 0 : i32
    %c0_i32_0 = arith.constant 0 : i32
    %c0_i32_1 = arith.constant 0 : i32
    return %c0_i32, %c0_i32_0 : i32, i32
  }
  func.func @transform_8(%arg0: i32, %arg1: i32) -> (i32, i32, i32) {
    %0 = arith.muli %arg1, %arg0 : i32
    %c0_i32 = arith.constant 0 : i32
    %c0_i32_0 = arith.constant 0 : i32
    %c0_i32_1 = arith.constant 0 : i32
    return %0, %c0_i32, %c0_i32_0 : i32, i32, i32
  }
}

</mosaic_0001>

<llo_original>
// kernel: tpu_custom_call.1
$region0: #{tpu_custom_call.1}
  #allocation0 [shape = 'u32[]', space=smem, size = 0x4, offset = 0x4, fixed_abs, tag = 'smem constant byte address 0x4 - core index']
  #allocation1 [shape = 'u32[144,128]{1,0:T(1,128)}', space=vmem, size = 0x12000, scoped, tag = 'internal scratch']
  #allocation2 [shape = 'f32[32,1]{1,0:T(8,128)}', space=vmem, size = 0x4000, scoped, tag = 'scratch operand']
  #allocation3 [shape = 'f32[32,1]{1,0:T(8,128)}', space=vmem, size = 0x4000, scoped, tag = 'scratch operand']
  %s0 = inlined_call_operand.vmem [shape: f32[2,32,256], index: 0, kind: input, shape index: {}]
  %s1 = inlined_call_operand.vmem [shape: f32[9,32,1], index: 1, kind: input, shape index: {}]
  %s2 = inlined_call_operand.vmem [shape: f32[32,1], index: 2, kind: input, shape index: {}]
  %s3 = inlined_call_operand.vmem [shape: f32[32,1], index: 3, kind: input, shape index: {}]
  %s4 = inlined_call_operand.vmem [shape: f32[32,32], index: 4, kind: input, shape index: {}]
  %s5 = inlined_call_operand.vmem [shape: f32[2,32], index: 5, kind: input, shape index: {}]
  %s6 = inlined_call_operand.vmem [shape: f32[32,2], index: 6, kind: input, shape index: {}]
  %s7 = inlined_call_operand.vmem [shape: f32[2,1], index: 7, kind: input, shape index: {}]
  %s8 = inlined_call_operand.hbm [shape: f32[2,32,256], index: 8, kind: output, shape index: {}]
  %s9 = sld [smem:[#allocation0]]
  $region77: #{tpu_custom_call.1} parent=0
    _
  %s11 = ssub.s32 1, %s9
  %s12 = scalar_select 0, %s11, %s9
  $region1: #{tpu_custom_call.1} parent=0
    #allocation4 [shape = 'u8[131072]{0}', space=vmem, size = 0x20000, scoped, tag = 'output window, operand 0']
    #allocation5 [shape = 's32[2]{0}', space=sflag, size = 0x8, scoped, tag = 'scoped memory for tpu_custom_call.1']
    %13 = vsyncpa [#allocation5], 0
    %s14 = scalar_lea.sflag [#allocation5], 1
    %15 = vsyncpa %s14, 0
    loop: start=0, step=1, limit=4
    $region2: #{tpu_custom_call.1} parent=1 // loop_pre_header
      _
    $region3: #{tpu_custom_call.1} parent=1 // loop_header
      %s17 = sphi 0, %s21
      %p18 = scmp.ge.s32.totalorder %s17, 4
      %s24 = sphi 0, %s36
      %s25 = sphi 0, %s32
      %s26 = sphi 0, %s24
      %s27 = sphi 0, %s25
      %s28 = sphi 0, %s26
      %s29 = sphi 0, %s27
      %s39 = sphi 0, %s41
      %s42 = sphi 0, %s39
      %s43 = sphi 0, %s42
      %s59 = sphi 0, %s43
      %s63 = sphi 0, %s63
      %s65 = sphi 0, %s63
      %s66 = sphi 0, %s65
      %s80 = sphi 0, %s66
      %s84 = sphi 0, %s84
      %s86 = sphi 0, %s84
      %s87 = sphi 0, %s86
      %s101 = sphi 0, %s87
      %s105 = sphi 0, %s105
      %s107 = sphi 0, %s105
      %s108 = sphi 0, %s107
      %s122 = sphi 0, %s108
      %s126 = sphi 0, %s126
      %s128 = sphi 0, %s126
      %s129 = sphi 0, %s128
      %s143 = sphi 0, %s129
      %s147 = sphi 0, %s147
      %s149 = sphi 0, %s147
      %s150 = sphi 0, %s149
      %s164 = sphi 0, %s150
      %s168 = sphi 0, %s168
      %s170 = sphi 0, %s168
      %s171 = sphi 0, %s170
      %s185 = sphi 0, %s171
      %s189 = sphi 0, %s189
      %s191 = sphi 0, %s189
      %s192 = sphi 0, %s191
      %s206 = sphi 0, %s192
      %s214 = sphi 0, %s216
      %s217 = sphi 0, %s214
      %s218 = sphi 0, %s217
      %s234 = sphi 0, %s218
    $region4: #{tpu_custom_call.1} parent=1 // loop_header_branch
      %20 = sbr.rel (%p18) target = $region8
    $region5: #{tpu_custom_call.1} parent=1 // loop_body
      %s22 = ssub.s32 %s17, 1
      %s23 = ssub.s32 %s17, 2
      %s30 = sadd.s32 1, %s25
      %p31 = scmp.ge.s32.totalorder %s30, 1
      %s32 = scalar_select %p31, 0, %s30
      %s33 = sadd.s32 1, %s24
      %s34 = scalar_select %p31, %s33, %s24
      %p35 = scmp.ge.s32.totalorder %s34, 2
      %s36 = scalar_select %p35, 0, %s34
      %s37 = ssub.s32 %s25, %s32
      %p38 = scmp.eq.s32.totalorder %s37, 0
      %s40 = sadd.s32 %s39, 1
      %s41 = scalar_select %p38, %s39, %s40
      %p44 = pneg %p38
      %p45 = scmp.eq.s32.totalorder %s17, 1
      %p46 = por %p44, %p45
      %p47 = scmp.ne.s32.totalorder %s39, %s42
      %p48 = scmp.eq.s32.totalorder %s17, 0
      %p49 = por %p47, %p48
      %p50 = scmp.ne.s32.totalorder %s39, %s42
      %p51 = scmp.eq.s32.totalorder %s22, 1
      %p52 = por %p50, %p51
      %p53 = scmp.ne.s32.totalorder %s42, %s43
      %p54 = scmp.eq.s32.totalorder %s22, 0
      %p55 = por %p53, %p54
      %p56 = scmp.ne.s32.totalorder %s42, %s43
      %p57 = scmp.eq.s32.totalorder %s23, 1
      %p58 = por %p56, %p57
      %p60 = scmp.ne.s32.totalorder %s43, %s59
      %p61 = scmp.eq.s32.totalorder %s23, 0
      %p62 = por %p60, %p61
      %s64 = sadd.s32 %s63, 1
      %p67 = scmp.eq.s32.totalorder %s17, 1
      %p68 = scmp.ne.s32.totalorder %s63, %s65
      %p69 = scmp.eq.s32.totalorder %s17, 0
      %p70 = por %p68, %p69
      %p71 = scmp.ne.s32.totalorder %s63, %s65
      %p72 = scmp.eq.s32.totalorder %s22, 1
      %p73 = por %p71, %p72
      %p74 = scmp.ne.s32.totalorder %s65, %s66
      %p75 = scmp.eq.s32.totalorder %s22, 0
      %p76 = por %p74, %p75
      %p77 = scmp.ne.s32.totalorder %s65, %s66
      %p78 = scmp.eq.s32.totalorder %s23, 1
      %p79 = por %p77, %p78
      %p81 = scmp.ne.s32.totalorder %s66, %s80
      %p82 = scmp.eq.s32.totalorder %s23, 0
      %p83 = por %p81, %p82
      %s85 = sadd.s32 %s84, 1
      %p88 = scmp.eq.s32.totalorder %s17, 1
      %p89 = scmp.ne.s32.totalorder %s84, %s86
      %p90 = scmp.eq.s32.totalorder %s17, 0
      %p91 = por %p89, %p90
      %p92 = scmp.ne.s32.totalorder %s84, %s86
      %p93 = scmp.eq.s32.totalorder %s22, 1
      %p94 = por %p92, %p93
      %p95 = scmp.ne.s32.totalorder %s86, %s87
      %p96 = scmp.eq.s32.totalorder %s22, 0
      %p97 = por %p95, %p96
      %p98 = scmp.ne.s32.totalorder %s86, %s87
      %p99 = scmp.eq.s32.totalorder %s23, 1
      %p100 = por %p98, %p99
      %p102 = scmp.ne.s32.totalorder %s87, %s101
      %p103 = scmp.eq.s32.totalorder %s23, 0
      %p104 = por %p102, %p103
      %s106 = sadd.s32 %s105, 1
      %p109 = scmp.eq.s32.totalorder %s17, 1
      %p110 = scmp.ne.s32.totalorder %s105, %s107
      %p111 = scmp.eq.s32.totalorder %s17, 0
      %p112 = por %p110, %p111
      %p113 = scmp.ne.s32.totalorder %s105, %s107
      %p114 = scmp.eq.s32.totalorder %s22, 1
      %p115 = por %p113, %p114
      %p116 = scmp.ne.s32.totalorder %s107, %s108
      %p117 = scmp.eq.s32.totalorder %s22, 0
      %p118 = por %p116, %p117
      %p119 = scmp.ne.s32.totalorder %s107, %s108
      %p120 = scmp.eq.s32.totalorder %s23, 1
      %p121 = por %p119, %p120
      %p123 = scmp.ne.s32.totalorder %s108, %s122
      %p124 = scmp.eq.s32.totalorder %s23, 0
      %p125 = por %p123, %p124
      %s127 = sadd.s32 %s126, 1
      %p130 = scmp.eq.s32.totalorder %s17, 1
      %p131 = scmp.ne.s32.totalorder %s126, %s128
      %p132 = scmp.eq.s32.totalorder %s17, 0
      %p133 = por %p131, %p132
      %p134 = scmp.ne.s32.totalorder %s126, %s128
      %p135 = scmp.eq.s32.totalorder %s22, 1
      %p136 = por %p134, %p135
      %p137 = scmp.ne.s32.totalorder %s128, %s129
      %p138 = scmp.eq.s32.totalorder %s22, 0
      %p139 = por %p137, %p138
      %p140 = scmp.ne.s32.totalorder %s128, %s129
      %p141 = scmp.eq.s32.totalorder %s23, 1
      %p142 = por %p140, %p141
      %p144 = scmp.ne.s32.totalorder %s129, %s143
      %p145 = scmp.eq.s32.totalorder %s23, 0
      %p146 = por %p144, %p145
      %s148 = sadd.s32 %s147, 1
      %p151 = scmp.eq.s32.totalorder %s17, 1
      %p152 = scmp.ne.s32.totalorder %s147, %s149
      %p153 = scmp.eq.s32.totalorder %s17, 0
      %p154 = por %p152, %p153
      %p155 = scmp.ne.s32.totalorder %s147, %s149
      %p156 = scmp.eq.s32.totalorder %s22, 1
      %p157 = por %p155, %p156
      %p158 = scmp.ne.s32.totalorder %s149, %s150
      %p159 = scmp.eq.s32.totalorder %s22, 0
      %p160 = por %p158, %p159
      %p161 = scmp.ne.s32.totalorder %s149, %s150
      %p162 = scmp.eq.s32.totalorder %s23, 1
      %p163 = por %p161, %p162
      %p165 = scmp.ne.s32.totalorder %s150, %s164
      %p166 = scmp.eq.s32.totalorder %s23, 0
      %p167 = por %p165, %p166
      %s169 = sadd.s32 %s168, 1
      %p172 = scmp.eq.s32.totalorder %s17, 1
      %p173 = scmp.ne.s32.totalorder %s168, %s170
      %p174 = scmp.eq.s32.totalorder %s17, 0
      %p175 = por %p173, %p174
      %p176 = scmp.ne.s32.totalorder %s168, %s170
      %p177 = scmp.eq.s32.totalorder %s22, 1
      %p178 = por %p176, %p177
      %p179 = scmp.ne.s32.totalorder %s170, %s171
      %p180 = scmp.eq.s32.totalorder %s22, 0
      %p181 = por %p179, %p180
      %p182 = scmp.ne.s32.totalorder %s170, %s171
      %p183 = scmp.eq.s32.totalorder %s23, 1
      %p184 = por %p182, %p183
      %p186 = scmp.ne.s32.totalorder %s171, %s185
      %p187 = scmp.eq.s32.totalorder %s23, 0
      %p188 = por %p186, %p187
      %s190 = sadd.s32 %s189, 1
      %p193 = scmp.eq.s32.totalorder %s17, 1
      %p194 = scmp.ne.s32.totalorder %s189, %s191
      %p195 = scmp.eq.s32.totalorder %s17, 0
      %p196 = por %p194, %p195
      %p197 = scmp.ne.s32.totalorder %s189, %s191
      %p198 = scmp.eq.s32.totalorder %s22, 1
      %p199 = por %p197, %p198
      %p200 = scmp.ne.s32.totalorder %s191, %s192
      %p201 = scmp.eq.s32.totalorder %s22, 0
      %p202 = por %p200, %p201
      %p203 = scmp.ne.s32.totalorder %s191, %s192
      %p204 = scmp.eq.s32.totalorder %s23, 1
      %p205 = por %p203, %p204
      %p207 = scmp.ne.s32.totalorder %s192, %s206
      %p208 = scmp.eq.s32.totalorder %s23, 0
      %p209 = por %p207, %p208
      %s210 = smul.u32 %s25, %s24
      %s211 = smul.u32 %s32, %s36
      %s212 = ssub.s32 %s210, %s211
      %p213 = scmp.eq.s32.totalorder %s212, 0
      %s215 = sadd.s32 %s214, 1
      %s216 = scalar_select %p213, %s214, %s215
      %p219 = pneg %p213
      %p220 = scmp.eq.s32.totalorder %s17, 1
      %p221 = por %p219, %p220
      %p222 = scmp.ne.s32.totalorder %s214, %s217
      %p223 = scmp.eq.s32.totalorder %s17, 0
      %p224 = por %p222, %p223
      %p225 = scmp.ne.s32.totalorder %s214, %s217
      %p226 = scmp.eq.s32.totalorder %s22, 1
      %p227 = por %p225, %p226
      %p228 = scmp.ne.s32.totalorder %s217, %s218
      %p229 = scmp.eq.s32.totalorder %s22, 0
      %p230 = por %p228, %p229
      %p231 = scmp.ne.s32.totalorder %s217, %s218
      %p232 = scmp.eq.s32.totalorder %s23, 1
      %p233 = por %p231, %p232
      %p235 = scmp.ne.s32.totalorder %s218, %s234
      %p236 = scmp.eq.s32.totalorder %s23, 0
      %p237 = por %p235, %p236
      %p238 = scmp.le.s32.totalorder 1, %s17
      %p239 = scmp.lt.s32.totalorder %s17, 3
      %p240 = pnand %p238, %p239
      %p241 = pneg %p240
      // Predicated region
      $region9: #{tpu_custom_call.1} parent=5 // pred_check
        _
      $region10: #{tpu_custom_call.1} parent=5 // pred_check_branch
        %243 = sbr.rel (%p240) target = $region12
      $region11: #{tpu_custom_call.1} parent=5 // pred_region
        %s244 = ssub.s32 %s17, 1
        // Predicated region
        $region13: #{tpu_custom_call.1} parent=11 // pred_check
          %p245 = pneg %p55
        $region14: #{tpu_custom_call.1} parent=11 // pred_check_branch
          %247 = sbr.rel (%p245) target = $region16
        $region15: #{tpu_custom_call.1} parent=11 // pred_region
          %s248 = smul.u32 2, %s27
          %p249 = scmp.lt.s32.totalorder %s248, 1
          %s250 = scalar_select %p249, %s248, 1
          %s251 = smul.addr %s250, 8
          %s252 = smul.addr %s251, 8
          %s253 = scalar_lea.vmem %s0, %s252
          %s254 = smul.u32 2, %s27
        $region16: #{tpu_custom_call.1} parent=11 // pred_fallthru
          _
        // Predicated region
        $region17: #{tpu_custom_call.1} parent=11 // pred_check
          %p255 = pneg %p76
        $region18: #{tpu_custom_call.1} parent=11 // pred_check_branch
          %257 = sbr.rel (%p255) target = $region20
        $region19: #{tpu_custom_call.1} parent=11 // pred_region
          _
        $region20: #{tpu_custom_call.1} parent=11 // pred_fallthru
          _
        // Predicated region
        $region21: #{tpu_custom_call.1} parent=11 // pred_check
          %p258 = pneg %p97
        $region22: #{tpu_custom_call.1} parent=11 // pred_check_branch
          %260 = sbr.rel (%p258) target = $region24
        $region23: #{tpu_custom_call.1} parent=11 // pred_region
          _
        $region24: #{tpu_custom_call.1} parent=11 // pred_fallthru
          _
        // Predicated region
        $region25: #{tpu_custom_call.1} parent=11 // pred_check
          %p261 = pneg %p118
        $region26: #{tpu_custom_call.1} parent=11 // pred_check_branch
          %263 = sbr.rel (%p261) target = $region28
        $region27: #{tpu_custom_call.1} parent=11 // pred_region
          _
        $region28: #{tpu_custom_call.1} parent=11 // pred_fallthru
          _
        // Predicated region
        $region29: #{tpu_custom_call.1} parent=11 // pred_check
          %p264 = pneg %p139
        $region30: #{tpu_custom_call.1} parent=11 // pred_check_branch
          %266 = sbr.rel (%p264) target = $region32
        $region31: #{tpu_custom_call.1} parent=11 // pred_region
          _
        $region32: #{tpu_custom_call.1} parent=11 // pred_fallthru
          _
        // Predicated region
        $region33: #{tpu_custom_call.1} parent=11 // pred_check
          %p267 = pneg %p160
        $region34: #{tpu_custom_call.1} parent=11 // pred_check_branch
          %269 = sbr.rel (%p267) target = $region36
        $region35: #{tpu_custom_call.1} parent=11 // pred_region
          _
        $region36: #{tpu_custom_call.1} parent=11 // pred_fallthru
          _
        // Predicated region
        $region37: #{tpu_custom_call.1} parent=11 // pred_check
          %p270 = pneg %p181
        $region38: #{tpu_custom_call.1} parent=11 // pred_check_branch
          %272 = sbr.rel (%p270) target = $region40
        $region39: #{tpu_custom_call.1} parent=11 // pred_region
          _
        $region40: #{tpu_custom_call.1} parent=11 // pred_fallthru
          _
        // Predicated region
        $region41: #{tpu_custom_call.1} parent=11 // pred_check
          %p273 = pneg %p202
        $region42: #{tpu_custom_call.1} parent=11 // pred_check_branch
          %275 = sbr.rel (%p273) target = $region44
        $region43: #{tpu_custom_call.1} parent=11 // pred_region
          _
        $region44: #{tpu_custom_call.1} parent=11 // pred_fallthru
          _
      $region12: #{tpu_custom_call.1} parent=5 // pred_fallthru
        _
      %p276 = scmp.lt.s32.totalorder %s17, 2
      // Predicated region
      $region45: #{tpu_custom_call.1} parent=5 // pred_check
        %p277 = pneg %p276
      $region46: #{tpu_custom_call.1} parent=5 // pred_check_branch
        %279 = sbr.rel (%p277) target = $region48
      $region47: #{tpu_custom_call.1} parent=5 // pred_region
        _
      $region48: #{tpu_custom_call.1} parent=5 // pred_fallthru
        _
      %p280 = scmp.le.s32.totalorder 1, %s17
      %p281 = scmp.lt.s32.totalorder %s17, 3
      %p282 = pnand %p280, %p281
      %p283 = pneg %p282
      // Predicated region
      $region49: #{tpu_custom_call.1} parent=5 // pred_check
        _
      $region50: #{tpu_custom_call.1} parent=5 // pred_check_branch
        %285 = sbr.rel (%p282) target = $region52
      $region51: #{tpu_custom_call.1} parent=5 // pred_region
        %s286 = ssub.s32 %s17, 1
        %s287 = smul.u32 2, %s27
        %p288 = scmp.lt.s32.totalorder %s287, 1
        %s289 = scalar_select %p288, %s287, 1
        %s290 = smul.addr %s289, 8
        %s291 = smul.addr %s290, 8
        %s292 = scalar_lea.vmem %s0, %s291
        %p293 = pneg %p55
        %p294 = pneg %p52
        %p295 = pneg %p76
        %p296 = pneg %p73
        %p297 = pneg %p97
        %p298 = pneg %p94
        %p299 = pneg %p118
        %p300 = pneg %p115
        %p301 = pneg %p139
        %p302 = pneg %p136
        %p303 = pneg %p160
        %p304 = pneg %p157
        %p305 = pneg %p181
        %p306 = pneg %p178
        %p307 = pneg %p202
        %p308 = pneg %p199
        %p309 = pneg %p230
        %p310 = pneg %p227
        %s311 = sand.u32 %s217, 1
        %s312 = scalar_lea.sflag [#allocation5], %s311
        %s313 = sand.u32 %s217, 1
        %s314 = smul.addr %s313, 128
        %s315 = scalar_lea.vmem [#allocation4], %s314
        %s316 = smul.u32 2, %s27
        %p317 = scmp.lt.s32.totalorder %s316, 1
        %s318 = scalar_select %p317, %s316, 1
        %s319 = smul.addr %s318, 8
        %s320 = smul.addr %s319, 8
        %s321 = scalar_lea.vmem %s0, %s320
        %s322 = smul.u32 2, %s27
        %s323 = smul.u32 %s27, %s26
        %s324 = smul.u32 2, %s323
        %v325 = vld [vmem:[%s321] sm:$0xff]
        %v326 = vld [vmem:[%s321 + $0x8] sm:$0xff]
        %v327 = vld [vmem:[%s321 + $0x10] sm:$0xff]
        %v328 = vld [vmem:[%s321 + $0x18] sm:$0xff]
        %v329 = vld [vmem:[%s321 + $0x20] sm:$0xff]
        %v330 = vld [vmem:[%s321 + $0x28] sm:$0xff]
        %v331 = vld [vmem:[%s321 + $0x30] sm:$0xff]
        %v332 = vld [vmem:[%s321 + $0x38] sm:$0xff]
        %v333 = vld [vmem:[%s321 + $0x40] sm:$0xff]
        %v334 = vld [vmem:[%s321 + $0x48] sm:$0xff]
        %v335 = vld [vmem:[%s321 + $0x50] sm:$0xff]
        %v336 = vld [vmem:[%s321 + $0x58] sm:$0xff]
        %v337 = vld [vmem:[%s321 + $0x60] sm:$0xff]
        %v338 = vld [vmem:[%s321 + $0x68] sm:$0xff]
        %v339 = vld [vmem:[%s321 + $0x70] sm:$0xff]
        %v340 = vld [vmem:[%s321 + $0x78] sm:$0xff]
        %v341 = vld [vmem:[%s1] sm:$0xff]
        %v342 = vld [vmem:[%s1 + $0x8] sm:$0xff]
        %v343 = vld [vmem:[%s1 + $0x10] sm:$0xff]
        %v344 = vld [vmem:[%s1 + $0x18] sm:$0xff]
        %v345 = vld [vmem:[%s1 + $0x20] sm:$0xff]
        %v346 = vld [vmem:[%s1 + $0x28] sm:$0xff]
        %v347 = vld [vmem:[%s1 + $0x30] sm:$0xff]
        %v348 = vld [vmem:[%s1 + $0x38] sm:$0xff]
        %v349 = vld [vmem:[%s1 + $0x40] sm:$0xff]
        %v350 = vld [vmem:[%s1 + $0x48] sm:$0xff]
        %v351 = vld [vmem:[%s1 + $0x50] sm:$0xff]
        %v352 = vld [vmem:[%s1 + $0x58] sm:$0xff]
        %v353 = vld [vmem:[%s1 + $0x60] sm:$0xff]
        %v354 = vld [vmem:[%s1 + $0x68] sm:$0xff]
        %v355 = vld [vmem:[%s1 + $0x70] sm:$0xff]
        %v356 = vld [vmem:[%s1 + $0x78] sm:$0xff]
        %v357 = vld [vmem:[%s1 + $0x80] sm:$0xff]
        %v358 = vld [vmem:[%s1 + $0x88] sm:$0xff]
        %v359 = vld [vmem:[%s1 + $0x90] sm:$0xff]
        %v360 = vld [vmem:[%s1 + $0x98] sm:$0xff]
        %v361 = vld [vmem:[%s1 + $0xa0] sm:$0xff]
        %v362 = vld [vmem:[%s1 + $0xa8] sm:$0xff]
        %v363 = vld [vmem:[%s1 + $0xb0] sm:$0xff]
        %v364 = vld [vmem:[%s1 + $0xb8] sm:$0xff]
        %v365 = vld [vmem:[%s1 + $0xc0] sm:$0xff]
        %v366 = vld [vmem:[%s1 + $0xc8] sm:$0xff]
        %v367 = vld [vmem:[%s1 + $0xd0] sm:$0xff]
        %v368 = vld [vmem:[%s1 + $0xd8] sm:$0xff]
        %v369 = vld [vmem:[%s1 + $0xe0] sm:$0xff]
        %v370 = vld [vmem:[%s1 + $0xe8] sm:$0xff]
        %v371 = vld [vmem:[%s1 + $0xf0] sm:$0xff]
        %v372 = vld [vmem:[%s1 + $0xf8] sm:$0xff]
        %v373 = vld [vmem:[%s1 + $0x100] sm:$0xff]
        %v374 = vld [vmem:[%s1 + $0x108] sm:$0xff]
        %v375 = vld [vmem:[%s1 + $0x110] sm:$0xff]
        %v376 = vld [vmem:[%s1 + $0x118] sm:$0xff]
        %v377 = vlaneseq
        %v378 = vand.u32 %v377, 127
        %v379 = vadd.s32 %v378, 128
        %vm380 = vcmp.lt.s32.totalorder %v378, 0
        %v381 = vsub.s32 0, %v378
        %v382 = vsel %vm380, %v381, %v378
        %v383 = vshrl.u32 %v382, 4
        %v384 = vand.u32 %v382, 15
        %v385 = vsub.s32 0, %v384
        %v386 = vsel %vm380, %v385, %v384
        %vm387 = vcmp.lt.s32.totalorder %v379, 0
        %v388 = vsub.s32 0, %v379
        %v389 = vsel %vm387, %v388, %v379
        %v390 = vshrl.u32 %v389, 4
        %v391 = vand.u32 %v389, 15
        %v392 = vsub.s32 0, %v391
        %v393 = vsel %vm387, %v392, %v391
        %vm394 = vcmp.ne.s32.totalorder %v386, 0
        %vm395 = vcmp.ne.s32.totalorder %v393, 0
        %vm396 = vcmp.lt.s32.totalorder %v386, 0
        %vm397 = vcmp.lt.s32.totalorder %v393, 0
        %vm398 = vmand %vm396, %vm394
        %vm399 = vmand %vm397, %vm395
        %v400 = vadd.s32 %v386, 16
        %v401 = vadd.s32 %v393, 16
        %v402 = vsel %vm398, %v400, %v386
        %v403 = vsel %vm399, %v401, %v393
        %vm404 = vcmp.ge.s32.totalorder %v402, 1
        %vm405 = vcmp.ge.s32.totalorder %v403, 1
        %vm406 = vcmp.lt.s32.totalorder %v402, 15
        %vm407 = vcmp.lt.s32.totalorder %v403, 15
        %409 = vset.pattern.permute.xlu0 0
        %410 = vperm.xlu0 %409, %v357
        %v411 = vpop.permute.xlu0 %410
        %414 = vset.pattern.permute.xlu0 0
        %415 = vperm.xlu0 %414, %v358
        %v416 = vpop.permute.xlu0 %415
        %419 = vset.pattern.permute.xlu0 0
        %420 = vperm.xlu0 %419, %v359
        %v421 = vpop.permute.xlu0 %420
        %424 = vset.pattern.permute.xlu0 0
        %425 = vperm.xlu0 %424, %v360
        %v426 = vpop.permute.xlu0 %425
        %v428 = vmul.f32 %v325, %v411
        %v429 = vmul.f32 %v326, %v411
        %v430 = vmul.f32 %v327, %v416
        %v431 = vmul.f32 %v328, %v416
        %v432 = vmul.f32 %v329, %v421
        %v433 = vmul.f32 %v330, %v421
        %v434 = vmul.f32 %v331, %v426
        %v435 = vmul.f32 %v332, %v426
        %v436 = vmul.f32 %v333, %v411
        %v437 = vmul.f32 %v334, %v411
        %v438 = vmul.f32 %v335, %v416
        %v439 = vmul.f32 %v336, %v416
        %v440 = vmul.f32 %v337, %v421
        %v441 = vmul.f32 %v338, %v421
        %v442 = vmul.f32 %v339, %v426
        %v443 = vmul.f32 %v340, %v426
        %v444 = vsel %vm404, 1, 0
        %v445 = vsel %vm405, 1, 0
        %vm446 = vcmp.eq.s32.totalorder %v444, 1
        %vm447 = vcmp.eq.s32.totalorder %v445, 1
        %465 = vrot.lane.b32.xlu0 0.0, 17
        %v466 = vpop.permute.xlu0 %465
        %467 = vrot.lane.b32.xlu0 %v325, 17
        %v468 = vpop.permute.xlu0 %467
        %469 = vrot.lane.b32.xlu0 %v326, 17
        %v470 = vpop.permute.xlu0 %469
        %471 = vrot.lane.b32.xlu0 %v327, 17
        %v472 = vpop.permute.xlu0 %471
        %473 = vrot.lane.b32.xlu0 %v328, 17
        %v474 = vpop.permute.xlu0 %473
        %475 = vrot.lane.b32.xlu0 %v329, 17
        %v476 = vpop.permute.xlu0 %475
        %477 = vrot.lane.b32.xlu0 %v330, 17
        %v478 = vpop.permute.xlu0 %477
        %479 = vrot.lane.b32.xlu0 %v331, 17
        %v480 = vpop.permute.xlu0 %479
        %481 = vrot.lane.b32.xlu0 %v332, 17
        %v482 = vpop.permute.xlu0 %481
        %483 = vrot.lane.b32.xlu0 %v333, 17
        %v484 = vpop.permute.xlu0 %483
        %485 = vrot.lane.b32.xlu0 %v334, 17
        %v486 = vpop.permute.xlu0 %485
        %487 = vrot.lane.b32.xlu0 %v335, 17
        %v488 = vpop.permute.xlu0 %487
        %489 = vrot.lane.b32.xlu0 %v336, 17
        %v490 = vpop.permute.xlu0 %489
        %491 = vrot.lane.b32.xlu0 %v337, 17
        %v492 = vpop.permute.xlu0 %491
        %493 = vrot.lane.b32.xlu0 %v338, 17
        %v494 = vpop.permute.xlu0 %493
        %495 = vrot.lane.b32.xlu0 %v339, 17
        %v496 = vpop.permute.xlu0 %495
        %497 = vrot.lane.b32.xlu0 %v340, 17
        %v498 = vpop.permute.xlu0 %497
        %vm499 = vcmask 138240
        %v500 = vsel %vm499, %v466, %v468
        %v501 = vsel %vm499, %v468, %v470
        %v502 = vsel %vm499, %v466, %v472
        %v503 = vsel %vm499, %v472, %v474
        %v504 = vsel %vm499, %v466, %v476
        %v505 = vsel %vm499, %v476, %v478
        %v506 = vsel %vm499, %v466, %v480
        %v507 = vsel %vm499, %v480, %v482
        %v508 = vsel %vm499, %v466, %v484
        %v509 = vsel %vm499, %v484, %v486
        %v510 = vsel %vm499, %v466, %v488
        %v511 = vsel %vm499, %v488, %v490
        %v512 = vsel %vm499, %v466, %v492
        %v513 = vsel %vm499, %v492, %v494
        %v514 = vsel %vm499, %v466, %v496
        %v515 = vsel %vm499, %v496, %v498
        %v532 = vsel %vm446, %v500, 0.0
        %v533 = vsel %vm447, %v501, 0.0
        %v534 = vsel %vm446, %v502, 0.0
        %v535 = vsel %vm447, %v503, 0.0
        %v536 = vsel %vm446, %v504, 0.0
        %v537 = vsel %vm447, %v505, 0.0
        %v538 = vsel %vm446, %v506, 0.0
        %v539 = vsel %vm447, %v507, 0.0
        %v540 = vsel %vm446, %v508, 0.0
        %v541 = vsel %vm447, %v509, 0.0
        %v542 = vsel %vm446, %v510, 0.0
        %v543 = vsel %vm447, %v511, 0.0
        %v544 = vsel %vm446, %v512, 0.0
        %v545 = vsel %vm447, %v513, 0.0
        %v546 = vsel %vm446, %v514, 0.0
        %v547 = vsel %vm447, %v515, 0.0
        %549 = vset.pattern.permute.xlu0 0
        %550 = vperm.xlu0 %549, %v341
        %v551 = vpop.permute.xlu0 %550
        %554 = vset.pattern.permute.xlu0 0
        %555 = vperm.xlu0 %554, %v342
        %v556 = vpop.permute.xlu0 %555
        %559 = vset.pattern.permute.xlu0 0
        %560 = vperm.xlu0 %559, %v343
        %v561 = vpop.permute.xlu0 %560
        %564 = vset.pattern.permute.xlu0 0
        %565 = vperm.xlu0 %564, %v344
        %v566 = vpop.permute.xlu0 %565
        %v568 = vmul.f32 %v532, %v551
        %v569 = vmul.f32 %v533, %v551
        %v570 = vmul.f32 %v534, %v556
        %v571 = vmul.f32 %v535, %v556
        %v572 = vmul.f32 %v536, %v561
        %v573 = vmul.f32 %v537, %v561
        %v574 = vmul.f32 %v538, %v566
        %v575 = vmul.f32 %v539, %v566
        %v576 = vmul.f32 %v540, %v551
        %v577 = vmul.f32 %v541, %v551
        %v578 = vmul.f32 %v542, %v556
        %v579 = vmul.f32 %v543, %v556
        %v580 = vmul.f32 %v544, %v561
        %v581 = vmul.f32 %v545, %v561
        %v582 = vmul.f32 %v546, %v566
        %v583 = vmul.f32 %v547, %v566
        %v584 = vadd.f32 %v428, %v568
        %v585 = vadd.f32 %v429, %v569
        %v586 = vadd.f32 %v430, %v570
        %v587 = vadd.f32 %v431, %v571
        %v588 = vadd.f32 %v432, %v572
        %v589 = vadd.f32 %v433, %v573
        %v590 = vadd.f32 %v434, %v574
        %v591 = vadd.f32 %v435, %v575
        %v592 = vadd.f32 %v436, %v576
        %v593 = vadd.f32 %v437, %v577
        %v594 = vadd.f32 %v438, %v578
        %v595 = vadd.f32 %v439, %v579
        %v596 = vadd.f32 %v440, %v580
        %v597 = vadd.f32 %v441, %v581
        %v598 = vadd.f32 %v442, %v582
        %v599 = vadd.f32 %v443, %v583
        %601 = vset.pattern.permute.xlu0 0
        %602 = vperm.xlu0 %601, %v345
        %v603 = vpop.permute.xlu0 %602
        %606 = vset.pattern.permute.xlu0 0
        %607 = vperm.xlu0 %606, %v346
        %v608 = vpop.permute.xlu0 %607
        %611 = vset.pattern.permute.xlu0 0
        %612 = vperm.xlu0 %611, %v347
        %v613 = vpop.permute.xlu0 %612
        %616 = vset.pattern.permute.xlu0 0
        %617 = vperm.xlu0 %616, %v348
        %v618 = vpop.permute.xlu0 %617
        %v620 = vmul.f32 %v603, 0.0
        %v621 = vmul.f32 %v325, %v603
        %v622 = vmul.f32 %v326, %v603
        %v623 = vmul.f32 %v608, 0.0
        %v624 = vmul.f32 %v327, %v608
        %v625 = vmul.f32 %v328, %v608
        %v626 = vmul.f32 %v613, 0.0
        %v627 = vmul.f32 %v329, %v613
        %v628 = vmul.f32 %v330, %v613
        %v629 = vmul.f32 %v618, 0.0
        %v630 = vmul.f32 %v331, %v618
        %v631 = vmul.f32 %v332, %v618
        %v632 = vmul.f32 %v333, %v603
        %v633 = vmul.f32 %v334, %v603
        %v634 = vmul.f32 %v335, %v608
        %v635 = vmul.f32 %v336, %v608
        %v636 = vmul.f32 %v337, %v613
        %v637 = vmul.f32 %v338, %v613
        %v638 = vmul.f32 %v339, %v618
        %v639 = vmul.f32 %v340, %v618
        %660 = vrot.lane.b32.xlu0 %v620, 16
        %v661 = vpop.permute.xlu0 %660
        %662 = vrot.lane.b32.xlu0 %v621, 16
        %v663 = vpop.permute.xlu0 %662
        %664 = vrot.lane.b32.xlu0 %v622, 16
        %v665 = vpop.permute.xlu0 %664
        %666 = vrot.lane.b32.xlu0 %v623, 16
        %v667 = vpop.permute.xlu0 %666
        %668 = vrot.lane.b32.xlu0 %v624, 16
        %v669 = vpop.permute.xlu0 %668
        %670 = vrot.lane.b32.xlu0 %v625, 16
        %v671 = vpop.permute.xlu0 %670
        %672 = vrot.lane.b32.xlu0 %v626, 16
        %v673 = vpop.permute.xlu0 %672
        %674 = vrot.lane.b32.xlu0 %v627, 16
        %v675 = vpop.permute.xlu0 %674
        %676 = vrot.lane.b32.xlu0 %v628, 16
        %v677 = vpop.permute.xlu0 %676
        %678 = vrot.lane.b32.xlu0 %v629, 16
        %v679 = vpop.permute.xlu0 %678
        %680 = vrot.lane.b32.xlu0 %v630, 16
        %v681 = vpop.permute.xlu0 %680
        %682 = vrot.lane.b32.xlu0 %v631, 16
        %v683 = vpop.permute.xlu0 %682
        %684 = vrot.lane.b32.xlu0 %v632, 16
        %v685 = vpop.permute.xlu0 %684
        %686 = vrot.lane.b32.xlu0 %v633, 16
        %v687 = vpop.permute.xlu0 %686
        %688 = vrot.lane.b32.xlu0 %v634, 16
        %v689 = vpop.permute.xlu0 %688
        %690 = vrot.lane.b32.xlu0 %v635, 16
        %v691 = vpop.permute.xlu0 %690
        %692 = vrot.lane.b32.xlu0 %v636, 16
        %v693 = vpop.permute.xlu0 %692
        %694 = vrot.lane.b32.xlu0 %v637, 16
        %v695 = vpop.permute.xlu0 %694
        %696 = vrot.lane.b32.xlu0 %v638, 16
        %v697 = vpop.permute.xlu0 %696
        %698 = vrot.lane.b32.xlu0 %v639, 16
        %v699 = vpop.permute.xlu0 %698
        %vm700 = vcmask 130048
        %v701 = vsel %vm700, %v661, %v663
        %v702 = vsel %vm700, %v663, %v665
        %v703 = vsel %vm700, %v667, %v669
        %v704 = vsel %vm700, %v669, %v671
        %v705 = vsel %vm700, %v673, %v675
        %v706 = vsel %vm700, %v675, %v677
        %v707 = vsel %vm700, %v679, %v681
        %v708 = vsel %vm700, %v681, %v683
        %v709 = vsel %vm700, %v661, %v685
        %v710 = vsel %vm700, %v685, %v687
        %v711 = vsel %vm700, %v667, %v689
        %v712 = vsel %vm700, %v689, %v691
        %v713 = vsel %vm700, %v673, %v693
        %v714 = vsel %vm700, %v693, %v695
        %v715 = vsel %vm700, %v679, %v697
        %v716 = vsel %vm700, %v697, %v699
        %v733 = vadd.f32 %v584, %v701
        %v734 = vadd.f32 %v585, %v702
        %v735 = vadd.f32 %v586, %v703
        %v736 = vadd.f32 %v587, %v704
        %v737 = vadd.f32 %v588, %v705
        %v738 = vadd.f32 %v589, %v706
        %v739 = vadd.f32 %v590, %v707
        %v740 = vadd.f32 %v591, %v708
        %v741 = vadd.f32 %v592, %v709
        %v742 = vadd.f32 %v593, %v710
        %v743 = vadd.f32 %v594, %v711
        %v744 = vadd.f32 %v595, %v712
        %v745 = vadd.f32 %v596, %v713
        %v746 = vadd.f32 %v597, %v714
        %v747 = vadd.f32 %v598, %v715
        %v748 = vadd.f32 %v599, %v716
        %v749 = vsel %vm406, 1, 0
        %v750 = vsel %vm407, 1, 0
        %vm751 = vcmp.eq.s32.totalorder %v749, 1
        %vm752 = vcmp.eq.s32.totalorder %v750, 1
        %753 = vrot.lane.b32.xlu0 0.0, 15
        %v754 = vpop.permute.xlu0 %753
        %755 = vrot.lane.b32.xlu0 %v325, 15
        %v756 = vpop.permute.xlu0 %755
        %757 = vrot.lane.b32.xlu0 %v326, 15
        %v758 = vpop.permute.xlu0 %757
        %759 = vrot.lane.b32.xlu0 %v327, 15
        %v760 = vpop.permute.xlu0 %759
        %761 = vrot.lane.b32.xlu0 %v328, 15
        %v762 = vpop.permute.xlu0 %761
        %763 = vrot.lane.b32.xlu0 %v329, 15
        %v764 = vpop.permute.xlu0 %763
        %765 = vrot.lane.b32.xlu0 %v330, 15
        %v766 = vpop.permute.xlu0 %765
        %767 = vrot.lane.b32.xlu0 %v331, 15
        %v768 = vpop.permute.xlu0 %767
        %769 = vrot.lane.b32.xlu0 %v332, 15
        %v770 = vpop.permute.xlu0 %769
        %771 = vrot.lane.b32.xlu0 %v333, 15
        %v772 = vpop.permute.xlu0 %771
        %773 = vrot.lane.b32.xlu0 %v334, 15
        %v774 = vpop.permute.xlu0 %773
        %775 = vrot.lane.b32.xlu0 %v335, 15
        %v776 = vpop.permute.xlu0 %775
        %777 = vrot.lane.b32.xlu0 %v336, 15
        %v778 = vpop.permute.xlu0 %777
        %779 = vrot.lane.b32.xlu0 %v337, 15
        %v780 = vpop.permute.xlu0 %779
        %781 = vrot.lane.b32.xlu0 %v338, 15
        %v782 = vpop.permute.xlu0 %781
        %783 = vrot.lane.b32.xlu0 %v339, 15
        %v784 = vpop.permute.xlu0 %783
        %785 = vrot.lane.b32.xlu0 %v340, 15
        %v786 = vpop.permute.xlu0 %785
        %vm787 = vcmask 121856
        %v788 = vsel %vm787, %v754, %v756
        %v789 = vsel %vm787, %v756, %v758
        %v790 = vsel %vm787, %v754, %v760
        %v791 = vsel %vm787, %v760, %v762
        %v792 = vsel %vm787, %v754, %v764
        %v793 = vsel %vm787, %v764, %v766
        %v794 = vsel %vm787, %v754, %v768
        %v795 = vsel %vm787, %v768, %v770
        %v796 = vsel %vm787, %v754, %v772
        %v797 = vsel %vm787, %v772, %v774
        %v798 = vsel %vm787, %v754, %v776
        %v799 = vsel %vm787, %v776, %v778
        %v800 = vsel %vm787, %v754, %v780
        %v801 = vsel %vm787, %v780, %v782
        %v802 = vsel %vm787, %v754, %v784
        %v803 = vsel %vm787, %v784, %v786
        %v820 = vsel %vm751, %v788, 0.0
        %v821 = vsel %vm752, %v789, 0.0
        %v822 = vsel %vm751, %v790, 0.0
        %v823 = vsel %vm752, %v791, 0.0
        %v824 = vsel %vm751, %v792, 0.0
        %v825 = vsel %vm752, %v793, 0.0
        %v826 = vsel %vm751, %v794, 0.0
        %v827 = vsel %vm752, %v795, 0.0
        %v828 = vsel %vm751, %v796, 0.0
        %v829 = vsel %vm752, %v797, 0.0
        %v830 = vsel %vm751, %v798, 0.0
        %v831 = vsel %vm752, %v799, 0.0
        %v832 = vsel %vm751, %v800, 0.0
        %v833 = vsel %vm752, %v801, 0.0
        %v834 = vsel %vm751, %v802, 0.0
        %v835 = vsel %vm752, %v803, 0.0
        %837 = vset.pattern.permute.xlu0 0
        %838 = vperm.xlu0 %837, %v349
        %v839 = vpop.permute.xlu0 %838
        %842 = vset.pattern.permute.xlu0 0
        %843 = vperm.xlu0 %842, %v350
        %v844 = vpop.permute.xlu0 %843
        %847 = vset.pattern.permute.xlu0 0
        %848 = vperm.xlu0 %847, %v351
        %v849 = vpop.permute.xlu0 %848
        %852 = vset.pattern.permute.xlu0 0
        %853 = vperm.xlu0 %852, %v352
        %v854 = vpop.permute.xlu0 %853
        %v856 = vmul.f32 %v820, %v839
        %v857 = vmul.f32 %v821, %v839
        %v858 = vmul.f32 %v822, %v844
        %v859 = vmul.f32 %v823, %v844
        %v860 = vmul.f32 %v824, %v849
        %v861 = vmul.f32 %v825, %v849
        %v862 = vmul.f32 %v826, %v854
        %v863 = vmul.f32 %v827, %v854
        %v864 = vmul.f32 %v828, %v839
        %v865 = vmul.f32 %v829, %v839
        %v866 = vmul.f32 %v830, %v844
        %v867 = vmul.f32 %v831, %v844
        %v868 = vmul.f32 %v832, %v849
        %v869 = vmul.f32 %v833, %v849
        %v870 = vmul.f32 %v834, %v854
        %v871 = vmul.f32 %v835, %v854
        %v872 = vadd.f32 %v733, %v856
        %v873 = vadd.f32 %v734, %v857
        %v874 = vadd.f32 %v735, %v858
        %v875 = vadd.f32 %v736, %v859
        %v876 = vadd.f32 %v737, %v860
        %v877 = vadd.f32 %v738, %v861
        %v878 = vadd.f32 %v739, %v862
        %v879 = vadd.f32 %v740, %v863
        %v880 = vadd.f32 %v741, %v864
        %v881 = vadd.f32 %v742, %v865
        %v882 = vadd.f32 %v743, %v866
        %v883 = vadd.f32 %v744, %v867
        %v884 = vadd.f32 %v745, %v868
        %v885 = vadd.f32 %v746, %v869
        %v886 = vadd.f32 %v747, %v870
        %v887 = vadd.f32 %v748, %v871
        %888 = vrot.lane.b32.xlu0 0.0, 1
        %v889 = vpop.permute.xlu0 %888
        %890 = vrot.lane.b32.xlu0 %v325, 1
        %v891 = vpop.permute.xlu0 %890
        %892 = vrot.lane.b32.xlu0 %v326, 1
        %v893 = vpop.permute.xlu0 %892
        %894 = vrot.lane.b32.xlu0 %v327, 1
        %v895 = vpop.permute.xlu0 %894
        %896 = vrot.lane.b32.xlu0 %v328, 1
        %v897 = vpop.permute.xlu0 %896
        %898 = vrot.lane.b32.xlu0 %v329, 1
        %v899 = vpop.permute.xlu0 %898
        %900 = vrot.lane.b32.xlu0 %v330, 1
        %v901 = vpop.permute.xlu0 %900
        %902 = vrot.lane.b32.xlu0 %v331, 1
        %v903 = vpop.permute.xlu0 %902
        %904 = vrot.lane.b32.xlu0 %v332, 1
        %v905 = vpop.permute.xlu0 %904
        %906 = vrot.lane.b32.xlu0 %v333, 1
        %v907 = vpop.permute.xlu0 %906
        %908 = vrot.lane.b32.xlu0 %v334, 1
        %v909 = vpop.permute.xlu0 %908
        %910 = vrot.lane.b32.xlu0 %v335, 1
        %v911 = vpop.permute.xlu0 %910
        %912 = vrot.lane.b32.xlu0 %v336, 1
        %v913 = vpop.permute.xlu0 %912
        %914 = vrot.lane.b32.xlu0 %v337, 1
        %v915 = vpop.permute.xlu0 %914
        %916 = vrot.lane.b32.xlu0 %v338, 1
        %v917 = vpop.permute.xlu0 %916
        %918 = vrot.lane.b32.xlu0 %v339, 1
        %v919 = vpop.permute.xlu0 %918
        %920 = vrot.lane.b32.xlu0 %v340, 1
        %v921 = vpop.permute.xlu0 %920
        %vm922 = vcmask 7168
        %v923 = vsel %vm922, %v889, %v891
        %v924 = vsel %vm922, %v891, %v893
        %v925 = vsel %vm922, %v889, %v895
        %v926 = vsel %vm922, %v895, %v897
        %v927 = vsel %vm922, %v889, %v899
        %v928 = vsel %vm922, %v899, %v901
        %v929 = vsel %vm922, %v889, %v903
        %v930 = vsel %vm922, %v903, %v905
        %v931 = vsel %vm922, %v889, %v907
        %v932 = vsel %vm922, %v907, %v909
        %v933 = vsel %vm922, %v889, %v911
        %v934 = vsel %vm922, %v911, %v913
        %v935 = vsel %vm922, %v889, %v915
        %v936 = vsel %vm922, %v915, %v917
        %v937 = vsel %vm922, %v889, %v919
        %v938 = vsel %vm922, %v919, %v921
        %v955 = vsel %vm446, %v923, 0.0
        %v956 = vsel %vm447, %v924, 0.0
        %v957 = vsel %vm446, %v925, 0.0
        %v958 = vsel %vm447, %v926, 0.0
        %v959 = vsel %vm446, %v927, 0.0
        %v960 = vsel %vm447, %v928, 0.0
        %v961 = vsel %vm446, %v929, 0.0
        %v962 = vsel %vm447, %v930, 0.0
        %v963 = vsel %vm446, %v931, 0.0
        %v964 = vsel %vm447, %v932, 0.0
        %v965 = vsel %vm446, %v933, 0.0
        %v966 = vsel %vm447, %v934, 0.0
        %v967 = vsel %vm446, %v935, 0.0
        %v968 = vsel %vm447, %v936, 0.0
        %v969 = vsel %vm446, %v937, 0.0
        %v970 = vsel %vm447, %v938, 0.0
        %972 = vset.pattern.permute.xlu0 0
        %973 = vperm.xlu0 %972, %v353
        %v974 = vpop.permute.xlu0 %973
        %977 = vset.pattern.permute.xlu0 0
        %978 = vperm.xlu0 %977, %v354
        %v979 = vpop.permute.xlu0 %978
        %982 = vset.pattern.permute.xlu0 0
        %983 = vperm.xlu0 %982, %v355
        %v984 = vpop.permute.xlu0 %983
        %987 = vset.pattern.permute.xlu0 0
        %988 = vperm.xlu0 %987, %v356
        %v989 = vpop.permute.xlu0 %988
        %v991 = vmul.f32 %v955, %v974
        %v992 = vmul.f32 %v956, %v974
        %v993 = vmul.f32 %v957, %v979
        %v994 = vmul.f32 %v958, %v979
        %v995 = vmul.f32 %v959, %v984
        %v996 = vmul.f32 %v960, %v984
        %v997 = vmul.f32 %v961, %v989
        %v998 = vmul.f32 %v962, %v989
        %v999 = vmul.f32 %v963, %v974
        %v1000 = vmul.f32 %v964, %v974
        %v1001 = vmul.f32 %v965, %v979
        %v1002 = vmul.f32 %v966, %v979
        %v1003 = vmul.f32 %v967, %v984
        %v1004 = vmul.f32 %v968, %v984
        %v1005 = vmul.f32 %v969, %v989
        %v1006 = vmul.f32 %v970, %v989
        %v1007 = vadd.f32 %v872, %v991
        %v1008 = vadd.f32 %v873, %v992
        %v1009 = vadd.f32 %v874, %v993
        %v1010 = vadd.f32 %v875, %v994
        %v1011 = vadd.f32 %v876, %v995
        %v1012 = vadd.f32 %v877, %v996
        %v1013 = vadd.f32 %v878, %v997
        %v1014 = vadd.f32 %v879, %v998
        %v1015 = vadd.f32 %v880, %v999
        %v1016 = vadd.f32 %v881, %v1000
        %v1017 = vadd.f32 %v882, %v1001
        %v1018 = vadd.f32 %v883, %v1002
        %v1019 = vadd.f32 %v884, %v1003
        %v1020 = vadd.f32 %v885, %v1004
        %v1021 = vadd.f32 %v886, %v1005
        %v1022 = vadd.f32 %v887, %v1006
        %1023 = vrot.lane.b32.xlu0 %v325, 127
        %v1024 = vpop.permute.xlu0 %1023
        %1025 = vrot.lane.b32.xlu0 %v326, 127
        %v1026 = vpop.permute.xlu0 %1025
        %1027 = vrot.lane.b32.xlu0 0.0, 127
        %v1028 = vpop.permute.xlu0 %1027
        %1029 = vrot.lane.b32.xlu0 %v327, 127
        %v1030 = vpop.permute.xlu0 %1029
        %1031 = vrot.lane.b32.xlu0 %v328, 127
        %v1032 = vpop.permute.xlu0 %1031
        %1033 = vrot.lane.b32.xlu0 %v329, 127
        %v1034 = vpop.permute.xlu0 %1033
        %1035 = vrot.lane.b32.xlu0 %v330, 127
        %v1036 = vpop.permute.xlu0 %1035
        %1037 = vrot.lane.b32.xlu0 %v331, 127
        %v1038 = vpop.permute.xlu0 %1037
        %1039 = vrot.lane.b32.xlu0 %v332, 127
        %v1040 = vpop.permute.xlu0 %1039
        %1041 = vrot.lane.b32.xlu0 %v333, 127
        %v1042 = vpop.permute.xlu0 %1041
        %1043 = vrot.lane.b32.xlu0 %v334, 127
        %v1044 = vpop.permute.xlu0 %1043
        %1045 = vrot.lane.b32.xlu0 %v335, 127
        %v1046 = vpop.permute.xlu0 %1045
        %1047 = vrot.lane.b32.xlu0 %v336, 127
        %v1048 = vpop.permute.xlu0 %1047
        %1049 = vrot.lane.b32.xlu0 %v337, 127
        %v1050 = vpop.permute.xlu0 %1049
        %1051 = vrot.lane.b32.xlu0 %v338, 127
        %v1052 = vpop.permute.xlu0 %1051
        %1053 = vrot.lane.b32.xlu0 %v339, 127
        %v1054 = vpop.permute.xlu0 %1053
        %1055 = vrot.lane.b32.xlu0 %v340, 127
        %v1056 = vpop.permute.xlu0 %1055
        %vm1057 = vcmask 1039360
        %v1058 = vsel %vm1057, %v1024, %v1026
        %v1059 = vsel %vm1057, %v1026, %v1028
        %v1060 = vsel %vm1057, %v1030, %v1032
        %v1061 = vsel %vm1057, %v1032, %v1028
        %v1062 = vsel %vm1057, %v1034, %v1036
        %v1063 = vsel %vm1057, %v1036, %v1028
        %v1064 = vsel %vm1057, %v1038, %v1040
        %v1065 = vsel %vm1057, %v1040, %v1028
        %v1066 = vsel %vm1057, %v1042, %v1044
        %v1067 = vsel %vm1057, %v1044, %v1028
        %v1068 = vsel %vm1057, %v1046, %v1048
        %v1069 = vsel %vm1057, %v1048, %v1028
        %v1070 = vsel %vm1057, %v1050, %v1052
        %v1071 = vsel %vm1057, %v1052, %v1028
        %v1072 = vsel %vm1057, %v1054, %v1056
        %v1073 = vsel %vm1057, %v1056, %v1028
        %v1090 = vsel %vm751, %v1058, 0.0
        %v1091 = vsel %vm752, %v1059, 0.0
        %v1092 = vsel %vm751, %v1060, 0.0
        %v1093 = vsel %vm752, %v1061, 0.0
        %v1094 = vsel %vm751, %v1062, 0.0
        %v1095 = vsel %vm752, %v1063, 0.0
        %v1096 = vsel %vm751, %v1064, 0.0
        %v1097 = vsel %vm752, %v1065, 0.0
        %v1098 = vsel %vm751, %v1066, 0.0
        %v1099 = vsel %vm752, %v1067, 0.0
        %v1100 = vsel %vm751, %v1068, 0.0
        %v1101 = vsel %vm752, %v1069, 0.0
        %v1102 = vsel %vm751, %v1070, 0.0
        %v1103 = vsel %vm752, %v1071, 0.0
        %v1104 = vsel %vm751, %v1072, 0.0
        %v1105 = vsel %vm752, %v1073, 0.0
        %1107 = vset.pattern.permute.xlu0 0
        %1108 = vperm.xlu0 %1107, %v361
        %v1109 = vpop.permute.xlu0 %1108
        %1112 = vset.pattern.permute.xlu0 0
        %1113 = vperm.xlu0 %1112, %v362
        %v1114 = vpop.permute.xlu0 %1113
        %1117 = vset.pattern.permute.xlu0 0
        %1118 = vperm.xlu0 %1117, %v363
        %v1119 = vpop.permute.xlu0 %1118
        %1122 = vset.pattern.permute.xlu0 0
        %1123 = vperm.xlu0 %1122, %v364
        %v1124 = vpop.permute.xlu0 %1123
        %v1126 = vmul.f32 %v1090, %v1109
        %v1127 = vmul.f32 %v1091, %v1109
        %v1128 = vmul.f32 %v1092, %v1114
        %v1129 = vmul.f32 %v1093, %v1114
        %v1130 = vmul.f32 %v1094, %v1119
        %v1131 = vmul.f32 %v1095, %v1119
        %v1132 = vmul.f32 %v1096, %v1124
        %v1133 = vmul.f32 %v1097, %v1124
        %v1134 = vmul.f32 %v1098, %v1109
        %v1135 = vmul.f32 %v1099, %v1109
        %v1136 = vmul.f32 %v1100, %v1114
        %v1137 = vmul.f32 %v1101, %v1114
        %v1138 = vmul.f32 %v1102, %v1119
        %v1139 = vmul.f32 %v1103, %v1119
        %v1140 = vmul.f32 %v1104, %v1124
        %v1141 = vmul.f32 %v1105, %v1124
        %v1142 = vadd.f32 %v1007, %v1126
        %v1143 = vadd.f32 %v1008, %v1127
        %v1144 = vadd.f32 %v1009, %v1128
        %v1145 = vadd.f32 %v1010, %v1129
        %v1146 = vadd.f32 %v1011, %v1130
        %v1147 = vadd.f32 %v1012, %v1131
        %v1148 = vadd.f32 %v1013, %v1132
        %v1149 = vadd.f32 %v1014, %v1133
        %v1150 = vadd.f32 %v1015, %v1134
        %v1151 = vadd.f32 %v1016, %v1135
        %v1152 = vadd.f32 %v1017, %v1136
        %v1153 = vadd.f32 %v1018, %v1137
        %v1154 = vadd.f32 %v1019, %v1138
        %v1155 = vadd.f32 %v1020, %v1139
        %v1156 = vadd.f32 %v1021, %v1140
        %v1157 = vadd.f32 %v1022, %v1141
        %1158 = vrot.lane.b32.xlu0 %v325, 113
        %v1159 = vpop.permute.xlu0 %1158
        %1160 = vrot.lane.b32.xlu0 %v326, 113
        %v1161 = vpop.permute.xlu0 %1160
        %1162 = vrot.lane.b32.xlu0 0.0, 113
        %v1163 = vpop.permute.xlu0 %1162
        %1164 = vrot.lane.b32.xlu0 %v327, 113
        %v1165 = vpop.permute.xlu0 %1164
        %1166 = vrot.lane.b32.xlu0 %v328, 113
        %v1167 = vpop.permute.xlu0 %1166
        %1168 = vrot.lane.b32.xlu0 %v329, 113
        %v1169 = vpop.permute.xlu0 %1168
        %1170 = vrot.lane.b32.xlu0 %v330, 113
        %v1171 = vpop.permute.xlu0 %1170
        %1172 = vrot.lane.b32.xlu0 %v331, 113
        %v1173 = vpop.permute.xlu0 %1172
        %1174 = vrot.lane.b32.xlu0 %v332, 113
        %v1175 = vpop.permute.xlu0 %1174
        %1176 = vrot.lane.b32.xlu0 %v333, 113
        %v1177 = vpop.permute.xlu0 %1176
        %1178 = vrot.lane.b32.xlu0 %v334, 113
        %v1179 = vpop.permute.xlu0 %1178
        %1180 = vrot.lane.b32.xlu0 %v335, 113
        %v1181 = vpop.permute.xlu0 %1180
        %1182 = vrot.lane.b32.xlu0 %v336, 113
        %v1183 = vpop.permute.xlu0 %1182
        %1184 = vrot.lane.b32.xlu0 %v337, 113
        %v1185 = vpop.permute.xlu0 %1184
        %1186 = vrot.lane.b32.xlu0 %v338, 113
        %v1187 = vpop.permute.xlu0 %1186
        %1188 = vrot.lane.b32.xlu0 %v339, 113
        %v1189 = vpop.permute.xlu0 %1188
        %1190 = vrot.lane.b32.xlu0 %v340, 113
        %v1191 = vpop.permute.xlu0 %1190
        %vm1192 = vcmask 924672
        %v1193 = vsel %vm1192, %v1159, %v1161
        %v1194 = vsel %vm1192, %v1161, %v1163
        %v1195 = vsel %vm1192, %v1165, %v1167
        %v1196 = vsel %vm1192, %v1167, %v1163
        %v1197 = vsel %vm1192, %v1169, %v1171
        %v1198 = vsel %vm1192, %v1171, %v1163
        %v1199 = vsel %vm1192, %v1173, %v1175
        %v1200 = vsel %vm1192, %v1175, %v1163
        %v1201 = vsel %vm1192, %v1177, %v1179
        %v1202 = vsel %vm1192, %v1179, %v1163
        %v1203 = vsel %vm1192, %v1181, %v1183
        %v1204 = vsel %vm1192, %v1183, %v1163
        %v1205 = vsel %vm1192, %v1185, %v1187
        %v1206 = vsel %vm1192, %v1187, %v1163
        %v1207 = vsel %vm1192, %v1189, %v1191
        %v1208 = vsel %vm1192, %v1191, %v1163
        %v1225 = vsel %vm446, %v1193, 0.0
        %v1226 = vsel %vm447, %v1194, 0.0
        %v1227 = vsel %vm446, %v1195, 0.0
        %v1228 = vsel %vm447, %v1196, 0.0
        %v1229 = vsel %vm446, %v1197, 0.0
        %v1230 = vsel %vm447, %v1198, 0.0
        %v1231 = vsel %vm446, %v1199, 0.0
        %v1232 = vsel %vm447, %v1200, 0.0
        %v1233 = vsel %vm446, %v1201, 0.0
        %v1234 = vsel %vm447, %v1202, 0.0
        %v1235 = vsel %vm446, %v1203, 0.0
        %v1236 = vsel %vm447, %v1204, 0.0
        %v1237 = vsel %vm446, %v1205, 0.0
        %v1238 = vsel %vm447, %v1206, 0.0
        %v1239 = vsel %vm446, %v1207, 0.0
        %v1240 = vsel %vm447, %v1208, 0.0
        %1242 = vset.pattern.permute.xlu0 0
        %1243 = vperm.xlu0 %1242, %v365
        %v1244 = vpop.permute.xlu0 %1243
        %1247 = vset.pattern.permute.xlu0 0
        %1248 = vperm.xlu0 %1247, %v366
        %v1249 = vpop.permute.xlu0 %1248
        %1252 = vset.pattern.permute.xlu0 0
        %1253 = vperm.xlu0 %1252, %v367
        %v1254 = vpop.permute.xlu0 %1253
        %1257 = vset.pattern.permute.xlu0 0
        %1258 = vperm.xlu0 %1257, %v368
        %v1259 = vpop.permute.xlu0 %1258
        %v1261 = vmul.f32 %v1225, %v1244
        %v1262 = vmul.f32 %v1226, %v1244
        %v1263 = vmul.f32 %v1227, %v1249
        %v1264 = vmul.f32 %v1228, %v1249
        %v1265 = vmul.f32 %v1229, %v1254
        %v1266 = vmul.f32 %v1230, %v1254
        %v1267 = vmul.f32 %v1231, %v1259
        %v1268 = vmul.f32 %v1232, %v1259
        %v1269 = vmul.f32 %v1233, %v1244
        %v1270 = vmul.f32 %v1234, %v1244
        %v1271 = vmul.f32 %v1235, %v1249
        %v1272 = vmul.f32 %v1236, %v1249
        %v1273 = vmul.f32 %v1237, %v1254
        %v1274 = vmul.f32 %v1238, %v1254
        %v1275 = vmul.f32 %v1239, %v1259
        %v1276 = vmul.f32 %v1240, %v1259
        %v1277 = vadd.f32 %v1142, %v1261
        %v1278 = vadd.f32 %v1143, %v1262
        %v1279 = vadd.f32 %v1144, %v1263
        %v1280 = vadd.f32 %v1145, %v1264
        %v1281 = vadd.f32 %v1146, %v1265
        %v1282 = vadd.f32 %v1147, %v1266
        %v1283 = vadd.f32 %v1148, %v1267
        %v1284 = vadd.f32 %v1149, %v1268
        %v1285 = vadd.f32 %v1150, %v1269
        %v1286 = vadd.f32 %v1151, %v1270
        %v1287 = vadd.f32 %v1152, %v1271
        %v1288 = vadd.f32 %v1153, %v1272
        %v1289 = vadd.f32 %v1154, %v1273
        %v1290 = vadd.f32 %v1155, %v1274
        %v1291 = vadd.f32 %v1156, %v1275
        %v1292 = vadd.f32 %v1157, %v1276
        %1294 = vset.pattern.permute.xlu0 0
        %1295 = vperm.xlu0 %1294, %v369
        %v1296 = vpop.permute.xlu0 %1295
        %1299 = vset.pattern.permute.xlu0 0
        %1300 = vperm.xlu0 %1299, %v370
        %v1301 = vpop.permute.xlu0 %1300
        %1304 = vset.pattern.permute.xlu0 0
        %1305 = vperm.xlu0 %1304, %v371
        %v1306 = vpop.permute.xlu0 %1305
        %1309 = vset.pattern.permute.xlu0 0
        %1310 = vperm.xlu0 %1309, %v372
        %v1311 = vpop.permute.xlu0 %1310
        %v1313 = vmul.f32 %v325, %v1296
        %v1314 = vmul.f32 %v326, %v1296
        %v1315 = vmul.f32 %v1296, 0.0
        %v1316 = vmul.f32 %v327, %v1301
        %v1317 = vmul.f32 %v328, %v1301
        %v1318 = vmul.f32 %v1301, 0.0
        %v1319 = vmul.f32 %v329, %v1306
        %v1320 = vmul.f32 %v330, %v1306
        %v1321 = vmul.f32 %v1306, 0.0
        %v1322 = vmul.f32 %v331, %v1311
        %v1323 = vmul.f32 %v332, %v1311
        %v1324 = vmul.f32 %v1311, 0.0
        %v1325 = vmul.f32 %v333, %v1296
        %v1326 = vmul.f32 %v334, %v1296
        %v1327 = vmul.f32 %v335, %v1301
        %v1328 = vmul.f32 %v336, %v1301
        %v1329 = vmul.f32 %v337, %v1306
        %v1330 = vmul.f32 %v338, %v1306
        %v1331 = vmul.f32 %v339, %v1311
        %v1332 = vmul.f32 %v340, %v1311
        %1353 = vrot.lane.b32.xlu0 %v1313, 112
        %v1354 = vpop.permute.xlu0 %1353
        %1355 = vrot.lane.b32.xlu0 %v1314, 112
        %v1356 = vpop.permute.xlu0 %1355
        %1357 = vrot.lane.b32.xlu0 %v1315, 112
        %v1358 = vpop.permute.xlu0 %1357
        %1359 = vrot.lane.b32.xlu0 %v1316, 112
        %v1360 = vpop.permute.xlu0 %1359
        %1361 = vrot.lane.b32.xlu0 %v1317, 112
        %v1362 = vpop.permute.xlu0 %1361
        %1363 = vrot.lane.b32.xlu0 %v1318, 112
        %v1364 = vpop.permute.xlu0 %1363
        %1365 = vrot.lane.b32.xlu0 %v1319, 112
        %v1366 = vpop.permute.xlu0 %1365
        %1367 = vrot.lane.b32.xlu0 %v1320, 112
        %v1368 = vpop.permute.xlu0 %1367
        %1369 = vrot.lane.b32.xlu0 %v1321, 112
        %v1370 = vpop.permute.xlu0 %1369
        %1371 = vrot.lane.b32.xlu0 %v1322, 112
        %v1372 = vpop.permute.xlu0 %1371
        %1373 = vrot.lane.b32.xlu0 %v1323, 112
        %v1374 = vpop.permute.xlu0 %1373
        %1375 = vrot.lane.b32.xlu0 %v1324, 112
        %v1376 = vpop.permute.xlu0 %1375
        %1377 = vrot.lane.b32.xlu0 %v1325, 112
        %v1378 = vpop.permute.xlu0 %1377
        %1379 = vrot.lane.b32.xlu0 %v1326, 112
        %v1380 = vpop.permute.xlu0 %1379
        %1381 = vrot.lane.b32.xlu0 %v1327, 112
        %v1382 = vpop.permute.xlu0 %1381
        %1383 = vrot.lane.b32.xlu0 %v1328, 112
        %v1384 = vpop.permute.xlu0 %1383
        %1385 = vrot.lane.b32.xlu0 %v1329, 112
        %v1386 = vpop.permute.xlu0 %1385
        %1387 = vrot.lane.b32.xlu0 %v1330, 112
        %v1388 = vpop.permute.xlu0 %1387
        %1389 = vrot.lane.b32.xlu0 %v1331, 112
        %v1390 = vpop.permute.xlu0 %1389
        %1391 = vrot.lane.b32.xlu0 %v1332, 112
        %v1392 = vpop.permute.xlu0 %1391
        %vm1393 = vcmask 916480
        %v1394 = vsel %vm1393, %v1354, %v1356
        %v1395 = vsel %vm1393, %v1356, %v1358
        %v1396 = vsel %vm1393, %v1360, %v1362
        %v1397 = vsel %vm1393, %v1362, %v1364
        %v1398 = vsel %vm1393, %v1366, %v1368
        %v1399 = vsel %vm1393, %v1368, %v1370
        %v1400 = vsel %vm1393, %v1372, %v1374
        %v1401 = vsel %vm1393, %v1374, %v1376
        %v1402 = vsel %vm1393, %v1378, %v1380
        %v1403 = vsel %vm1393, %v1380, %v1358
        %v1404 = vsel %vm1393, %v1382, %v1384
        %v1405 = vsel %vm1393, %v1384, %v1364
        %v1406 = vsel %vm1393, %v1386, %v1388
        %v1407 = vsel %vm1393, %v1388, %v1370
        %v1408 = vsel %vm1393, %v1390, %v1392
        %v1409 = vsel %vm1393, %v1392, %v1376
        %v1426 = vadd.f32 %v1277, %v1394
        %v1427 = vadd.f32 %v1278, %v1395
        %v1428 = vadd.f32 %v1279, %v1396
        %v1429 = vadd.f32 %v1280, %v1397
        %v1430 = vadd.f32 %v1281, %v1398
        %v1431 = vadd.f32 %v1282, %v1399
        %v1432 = vadd.f32 %v1283, %v1400
        %v1433 = vadd.f32 %v1284, %v1401
        %v1434 = vadd.f32 %v1285, %v1402
        %v1435 = vadd.f32 %v1286, %v1403
        %v1436 = vadd.f32 %v1287, %v1404
        %v1437 = vadd.f32 %v1288, %v1405
        %v1438 = vadd.f32 %v1289, %v1406
        %v1439 = vadd.f32 %v1290, %v1407
        %v1440 = vadd.f32 %v1291, %v1408
        %v1441 = vadd.f32 %v1292, %v1409
        %1442 = vrot.lane.b32.xlu0 %v325, 111
        %v1443 = vpop.permute.xlu0 %1442
        %1444 = vrot.lane.b32.xlu0 %v326, 111
        %v1445 = vpop.permute.xlu0 %1444
        %1446 = vrot.lane.b32.xlu0 0.0, 111
        %v1447 = vpop.permute.xlu0 %1446
        %1448 = vrot.lane.b32.xlu0 %v327, 111
        %v1449 = vpop.permute.xlu0 %1448
        %1450 = vrot.lane.b32.xlu0 %v328, 111
        %v1451 = vpop.permute.xlu0 %1450
        %1452 = vrot.lane.b32.xlu0 %v329, 111
        %v1453 = vpop.permute.xlu0 %1452
        %1454 = vrot.lane.b32.xlu0 %v330, 111
        %v1455 = vpop.permute.xlu0 %1454
        %1456 = vrot.lane.b32.xlu0 %v331, 111
        %v1457 = vpop.permute.xlu0 %1456
        %1458 = vrot.lane.b32.xlu0 %v332, 111
        %v1459 = vpop.permute.xlu0 %1458
        %1460 = vrot.lane.b32.xlu0 %v333, 111
        %v1461 = vpop.permute.xlu0 %1460
        %1462 = vrot.lane.b32.xlu0 %v334, 111
        %v1463 = vpop.permute.xlu0 %1462
        %1464 = vrot.lane.b32.xlu0 %v335, 111
        %v1465 = vpop.permute.xlu0 %1464
        %1466 = vrot.lane.b32.xlu0 %v336, 111
        %v1467 = vpop.permute.xlu0 %1466
        %1468 = vrot.lane.b32.xlu0 %v337, 111
        %v1469 = vpop.permute.xlu0 %1468
        %1470 = vrot.lane.b32.xlu0 %v338, 111
        %v1471 = vpop.permute.xlu0 %1470
        %1472 = vrot.lane.b32.xlu0 %v339, 111
        %v1473 = vpop.permute.xlu0 %1472
        %1474 = vrot.lane.b32.xlu0 %v340, 111
        %v1475 = vpop.permute.xlu0 %1474
        %vm1476 = vcmask 908288
        %v1477 = vsel %vm1476, %v1443, %v1445
        %v1478 = vsel %vm1476, %v1445, %v1447
        %v1479 = vsel %vm1476, %v1449, %v1451
        %v1480 = vsel %vm1476, %v1451, %v1447
        %v1481 = vsel %vm1476, %v1453, %v1455
        %v1482 = vsel %vm1476, %v1455, %v1447
        %v1483 = vsel %vm1476, %v1457, %v1459
        %v1484 = vsel %vm1476, %v1459, %v1447
        %v1485 = vsel %vm1476, %v1461, %v1463
        %v1486 = vsel %vm1476, %v1463, %v1447
        %v1487 = vsel %vm1476, %v1465, %v1467
        %v1488 = vsel %vm1476, %v1467, %v1447
        %v1489 = vsel %vm1476, %v1469, %v1471
        %v1490 = vsel %vm1476, %v1471, %v1447
        %v1491 = vsel %vm1476, %v1473, %v1475
        %v1492 = vsel %vm1476, %v1475, %v1447
        %v1509 = vsel %vm751, %v1477, 0.0
        %v1510 = vsel %vm752, %v1478, 0.0
        %v1511 = vsel %vm751, %v1479, 0.0
        %v1512 = vsel %vm752, %v1480, 0.0
        %v1513 = vsel %vm751, %v1481, 0.0
        %v1514 = vsel %vm752, %v1482, 0.0
        %v1515 = vsel %vm751, %v1483, 0.0
        %v1516 = vsel %vm752, %v1484, 0.0
        %v1517 = vsel %vm751, %v1485, 0.0
        %v1518 = vsel %vm752, %v1486, 0.0
        %v1519 = vsel %vm751, %v1487, 0.0
        %v1520 = vsel %vm752, %v1488, 0.0
        %v1521 = vsel %vm751, %v1489, 0.0
        %v1522 = vsel %vm752, %v1490, 0.0
        %v1523 = vsel %vm751, %v1491, 0.0
        %v1524 = vsel %vm752, %v1492, 0.0
        %1526 = vset.pattern.permute.xlu0 0
        %1527 = vperm.xlu0 %1526, %v373
        %v1528 = vpop.permute.xlu0 %1527
        %1531 = vset.pattern.permute.xlu0 0
        %1532 = vperm.xlu0 %1531, %v374
        %v1533 = vpop.permute.xlu0 %1532
        %1536 = vset.pattern.permute.xlu0 0
        %1537 = vperm.xlu0 %1536, %v375
        %v1538 = vpop.permute.xlu0 %1537
        %1541 = vset.pattern.permute.xlu0 0
        %1542 = vperm.xlu0 %1541, %v376
        %v1543 = vpop.permute.xlu0 %1542
        %v1545 = vmul.f32 %v1509, %v1528
        %v1546 = vmul.f32 %v1510, %v1528
        %v1547 = vmul.f32 %v1511, %v1533
        %v1548 = vmul.f32 %v1512, %v1533
        %v1549 = vmul.f32 %v1513, %v1538
        %v1550 = vmul.f32 %v1514, %v1538
        %v1551 = vmul.f32 %v1515, %v1543
        %v1552 = vmul.f32 %v1516, %v1543
        %v1553 = vmul.f32 %v1517, %v1528
        %v1554 = vmul.f32 %v1518, %v1528
        %v1555 = vmul.f32 %v1519, %v1533
        %v1556 = vmul.f32 %v1520, %v1533
        %v1557 = vmul.f32 %v1521, %v1538
        %v1558 = vmul.f32 %v1522, %v1538
        %v1559 = vmul.f32 %v1523, %v1543
        %v1560 = vmul.f32 %v1524, %v1543
        %v1561 = vadd.f32 %v1426, %v1545
        %v1562 = vadd.f32 %v1427, %v1546
        %v1563 = vadd.f32 %v1428, %v1547
        %v1564 = vadd.f32 %v1429, %v1548
        %v1565 = vadd.f32 %v1430, %v1549
        %v1566 = vadd.f32 %v1431, %v1550
        %v1567 = vadd.f32 %v1432, %v1551
        %v1568 = vadd.f32 %v1433, %v1552
        %v1569 = vadd.f32 %v1434, %v1553
        %v1570 = vadd.f32 %v1435, %v1554
        %v1571 = vadd.f32 %v1436, %v1555
        %v1572 = vadd.f32 %v1437, %v1556
        %v1573 = vadd.f32 %v1438, %v1557
        %v1574 = vadd.f32 %v1439, %v1558
        %v1575 = vadd.f32 %v1440, %v1559
        %v1576 = vadd.f32 %v1441, %v1560
        %p1577 = scmp.eq.s32.totalorder %s26, 0
        // Predicated region
        $region53: #{tpu_custom_call.1} parent=51 // pred_check
          %p1578 = pneg %p1577
        $region54: #{tpu_custom_call.1} parent=51 // pred_check_branch
          %1580 = sbr.rel (%p1578) target = $region56
        $region55: #{tpu_custom_call.1} parent=51 // pred_region
          %p1581 = scmp.eq.s32.totalorder %s27, 0
          // Predicated region
          $region57: #{tpu_custom_call.1} parent=55 // pred_check
            %p1582 = pneg %p1581
          $region58: #{tpu_custom_call.1} parent=55 // pred_check_branch
            %1584 = sbr.rel (%p1582) target = $region60
          $region59: #{tpu_custom_call.1} parent=55 // pred_region
            %1585 = vst.msk [vmem:[#allocation2] sm:$0xff] %vm922, 0.0
            %1586 = vst.msk [vmem:[#allocation2 + $0x8] sm:$0xff] %vm922, 0.0
            %1587 = vst.msk [vmem:[#allocation2 + $0x10] sm:$0xff] %vm922, 0.0
            %1588 = vst.msk [vmem:[#allocation2 + $0x18] sm:$0xff] %vm922, 0.0
            %1589 = vst.msk [vmem:[#allocation3] sm:$0xff] %vm922, 0.0
            %1590 = vst.msk [vmem:[#allocation3 + $0x8] sm:$0xff] %vm922, 0.0
            %1591 = vst.msk [vmem:[#allocation3 + $0x10] sm:$0xff] %vm922, 0.0
            %1592 = vst.msk [vmem:[#allocation3 + $0x18] sm:$0xff] %vm922, 0.0
          $region60: #{tpu_custom_call.1} parent=55 // pred_fallthru
            _
          %v1593 = vld [vmem:[#allocation2] sm:$0xff]
          %v1594 = vld [vmem:[#allocation2 + $0x8] sm:$0xff]
          %v1595 = vld [vmem:[#allocation2 + $0x10] sm:$0xff]
          %v1596 = vld [vmem:[#allocation2 + $0x18] sm:$0xff]
          %v1597 = vadd.f32 %v1561, %v1562
          %1598 = vadd.xlane.f32.xlu0 %v1597
          %v1599 = vpop.xlane.xlu0 %1598
          %v1600 = vadd.f32 %v1563, %v1564
          %1601 = vadd.xlane.f32.xlu0 %v1600
          %v1602 = vpop.xlane.xlu0 %1601
          %v1603 = vadd.f32 %v1565, %v1566
          %1604 = vadd.xlane.f32.xlu0 %v1603
          %v1605 = vpop.xlane.xlu0 %1604
          %v1606 = vadd.f32 %v1567, %v1568
          %1607 = vadd.xlane.f32.xlu0 %v1606
          %v1608 = vpop.xlane.xlu0 %1607
          %v1609 = vadd.f32 %v1569, %v1570
          %1610 = vadd.xlane.f32.xlu0 %v1609
          %v1611 = vpop.xlane.xlu0 %1610
          %v1612 = vadd.f32 %v1571, %v1572
          %1613 = vadd.xlane.f32.xlu0 %v1612
          %v1614 = vpop.xlane.xlu0 %1613
          %v1615 = vadd.f32 %v1573, %v1574
          %1616 = vadd.xlane.f32.xlu0 %v1615
          %v1617 = vpop.xlane.xlu0 %1616
          %v1618 = vadd.f32 %v1575, %v1576
          %1619 = vadd.xlane.f32.xlu0 %v1618
          %v1620 = vpop.xlane.xlu0 %1619
          %v1621 = vadd.f32 %v1599, %v1611
          %v1622 = vadd.f32 %v1602, %v1614
          %v1623 = vadd.f32 %v1605, %v1617
          %v1624 = vadd.f32 %v1608, %v1620
          %v1625 = vadd.f32 %v1593, %v1621
          %v1626 = vadd.f32 %v1594, %v1622
          %v1627 = vadd.f32 %v1595, %v1623
          %v1628 = vadd.f32 %v1596, %v1624
          %1629 = vst.msk [vmem:[#allocation2] sm:$0xff] %vm922, %v1625
          %1630 = vst.msk [vmem:[#allocation2 + $0x8] sm:$0xff] %vm922, %v1626
          %1631 = vst.msk [vmem:[#allocation2 + $0x10] sm:$0xff] %vm922, %v1627
          %1632 = vst.msk [vmem:[#allocation2 + $0x18] sm:$0xff] %vm922, %v1628
          %v1633 = vld [vmem:[#allocation3] sm:$0xff]
          %v1634 = vld [vmem:[#allocation3 + $0x8] sm:$0xff]
          %v1635 = vld [vmem:[#allocation3 + $0x10] sm:$0xff]
          %v1636 = vld [vmem:[#allocation3 + $0x18] sm:$0xff]
          %v1637 = vmul.f32 %v1561, %v1561
          %v1638 = vmul.f32 %v1562, %v1562
          %v1639 = vmul.f32 %v1563, %v1563
          %v1640 = vmul.f32 %v1564, %v1564
          %v1641 = vmul.f32 %v1565, %v1565
          %v1642 = vmul.f32 %v1566, %v1566
          %v1643 = vmul.f32 %v1567, %v1567
          %v1644 = vmul.f32 %v1568, %v1568
          %v1645 = vmul.f32 %v1569, %v1569
          %v1646 = vmul.f32 %v1570, %v1570
          %v1647 = vmul.f32 %v1571, %v1571
          %v1648 = vmul.f32 %v1572, %v1572
          %v1649 = vmul.f32 %v1573, %v1573
          %v1650 = vmul.f32 %v1574, %v1574
          %v1651 = vmul.f32 %v1575, %v1575
          %v1652 = vmul.f32 %v1576, %v1576
          %v1653 = vadd.f32 %v1637, %v1638
          %1654 = vadd.xlane.f32.xlu0 %v1653
          %v1655 = vpop.xlane.xlu0 %1654
          %v1656 = vadd.f32 %v1639, %v1640
          %1657 = vadd.xlane.f32.xlu0 %v1656
          %v1658 = vpop.xlane.xlu0 %1657
          %v1659 = vadd.f32 %v1641, %v1642
          %1660 = vadd.xlane.f32.xlu0 %v1659
          %v1661 = vpop.xlane.xlu0 %1660
          %v1662 = vadd.f32 %v1643, %v1644
          %1663 = vadd.xlane.f32.xlu0 %v1662
          %v1664 = vpop.xlane.xlu0 %1663
          %v1665 = vadd.f32 %v1645, %v1646
          %1666 = vadd.xlane.f32.xlu0 %v1665
          %v1667 = vpop.xlane.xlu0 %1666
          %v1668 = vadd.f32 %v1647, %v1648
          %1669 = vadd.xlane.f32.xlu0 %v1668
          %v1670 = vpop.xlane.xlu0 %1669
          %v1671 = vadd.f32 %v1649, %v1650
          %1672 = vadd.xlane.f32.xlu0 %v1671
          %v1673 = vpop.xlane.xlu0 %1672
          %v1674 = vadd.f32 %v1651, %v1652
          %1675 = vadd.xlane.f32.xlu0 %v1674
          %v1676 = vpop.xlane.xlu0 %1675
          %v1677 = vadd.f32 %v1655, %v1667
          %v1678 = vadd.f32 %v1658, %v1670
          %v1679 = vadd.f32 %v1661, %v1673
          %v1680 = vadd.f32 %v1664, %v1676
          %v1681 = vadd.f32 %v1633, %v1677
          %v1682 = vadd.f32 %v1634, %v1678
          %v1683 = vadd.f32 %v1635, %v1679
          %v1684 = vadd.f32 %v1636, %v1680
          %1685 = vst.msk [vmem:[#allocation3] sm:$0xff] %vm922, %v1681
          %1686 = vst.msk [vmem:[#allocation3 + $0x8] sm:$0xff] %vm922, %v1682
          %1687 = vst.msk [vmem:[#allocation3 + $0x10] sm:$0xff] %vm922, %v1683
          %1688 = vst.msk [vmem:[#allocation3 + $0x18] sm:$0xff] %vm922, %v1684
        $region56: #{tpu_custom_call.1} parent=51 // pred_fallthru
          _
        %p1689 = scmp.eq.s32.totalorder %s26, 1
        // Predicated region
        $region61: #{tpu_custom_call.1} parent=51 // pred_check
          %p1690 = pneg %p1689
        $region62: #{tpu_custom_call.1} parent=51 // pred_check_branch
          %1692 = sbr.rel (%p1690) target = $region64
        $region63: #{tpu_custom_call.1} parent=51 // pred_region
          %v1693 = vld [vmem:[#allocation2] sm:$0xff]
          %v1694 = vld [vmem:[#allocation2 + $0x8] sm:$0xff]
          %v1695 = vld [vmem:[#allocation2 + $0x10] sm:$0xff]
          %v1696 = vld [vmem:[#allocation2 + $0x18] sm:$0xff]
          %v1697 = vmul.f32 %v1693, 0.001953125
          %v1698 = vmul.f32 %v1694, 0.001953125
          %v1699 = vmul.f32 %v1695, 0.001953125
          %v1700 = vmul.f32 %v1696, 0.001953125
          %v1701 = vld [vmem:[#allocation3] sm:$0xff]
          %v1702 = vld [vmem:[#allocation3 + $0x8] sm:$0xff]
          %v1703 = vld [vmem:[#allocation3 + $0x10] sm:$0xff]
          %v1704 = vld [vmem:[#allocation3 + $0x18] sm:$0xff]
          %v1705 = vmul.f32 %v1701, 0.001953125
          %v1706 = vmul.f32 %v1702, 0.001953125
          %v1707 = vmul.f32 %v1703, 0.001953125
          %v1708 = vmul.f32 %v1704, 0.001953125
          %v1709 = vmul.f32 %v1697, %v1697
          %v1710 = vmul.f32 %v1698, %v1698
          %v1711 = vmul.f32 %v1699, %v1699
          %v1712 = vmul.f32 %v1700, %v1700
          %v1713 = vsub.f32 %v1705, %v1709
          %v1714 = vsub.f32 %v1706, %v1710
          %v1715 = vsub.f32 %v1707, %v1711
          %v1716 = vsub.f32 %v1708, %v1712
          %v1717 = vmax.f32 %v1713, 0.0
          %v1718 = vmax.f32 %v1714, 0.0
          %v1719 = vmax.f32 %v1715, 0.0
          %v1720 = vmax.f32 %v1716, 0.0
          %v1721 = vld [vmem:[%s2] sm:$0xff]
          %v1722 = vld [vmem:[%s2 + $0x8] sm:$0xff]
          %v1723 = vld [vmem:[%s2 + $0x10] sm:$0xff]
          %v1724 = vld [vmem:[%s2 + $0x18] sm:$0xff]
          %v1725 = vadd.f32 %v1717, 1e-05
          %v1726 = vadd.f32 %v1718, 1e-05
          %v1727 = vadd.f32 %v1719, 1e-05
          %v1728 = vadd.f32 %v1720, 1e-05
          %v1729 = vrsqrt.pop %v1725
          %v1730 = vrsqrt.pop %v1726
          %v1731 = vrsqrt.pop %v1727
          %v1732 = vrsqrt.pop %v1728
          %v1733 = vmul.f32 %v1721, %v1729
          %v1734 = vmul.f32 %v1722, %v1730
          %v1735 = vmul.f32 %v1723, %v1731
          %v1736 = vmul.f32 %v1724, %v1732
          %v1737 = vld [vmem:[%s3] sm:$0xff]
          %v1738 = vld [vmem:[%s3 + $0x8] sm:$0xff]
          %v1739 = vld [vmem:[%s3 + $0x10] sm:$0xff]
          %v1740 = vld [vmem:[%s3 + $0x18] sm:$0xff]
          %v1741 = vmul.f32 %v1697, %v1733
          %v1742 = vmul.f32 %v1698, %v1734
          %v1743 = vmul.f32 %v1699, %v1735
          %v1744 = vmul.f32 %v1700, %v1736
          %v1745 = vsub.f32 %v1737, %v1741
          %v1746 = vsub.f32 %v1738, %v1742
          %v1747 = vsub.f32 %v1739, %v1743
          %v1748 = vsub.f32 %v1740, %v1744
          %1750 = vset.pattern.permute.xlu0 0
          %1751 = vperm.xlu0 %1750, %v1733
          %v1752 = vpop.permute.xlu0 %1751
          %1755 = vset.pattern.permute.xlu0 0
          %1756 = vperm.xlu0 %1755, %v1734
          %v1757 = vpop.permute.xlu0 %1756
          %1760 = vset.pattern.permute.xlu0 0
          %1761 = vperm.xlu0 %1760, %v1735
          %v1762 = vpop.permute.xlu0 %1761
          %1765 = vset.pattern.permute.xlu0 0
          %1766 = vperm.xlu0 %1765, %v1736
          %v1767 = vpop.permute.xlu0 %1766
          %v1769 = vmul.f32 %v1561, %v1752
          %v1770 = vmul.f32 %v1562, %v1752
          %v1771 = vmul.f32 %v1563, %v1757
          %v1772 = vmul.f32 %v1564, %v1757
          %v1773 = vmul.f32 %v1565, %v1762
          %v1774 = vmul.f32 %v1566, %v1762
          %v1775 = vmul.f32 %v1567, %v1767
          %v1776 = vmul.f32 %v1568, %v1767
          %v1777 = vmul.f32 %v1569, %v1752
          %v1778 = vmul.f32 %v1570, %v1752
          %v1779 = vmul.f32 %v1571, %v1757
          %v1780 = vmul.f32 %v1572, %v1757
          %v1781 = vmul.f32 %v1573, %v1762
          %v1782 = vmul.f32 %v1574, %v1762
          %v1783 = vmul.f32 %v1575, %v1767
          %v1784 = vmul.f32 %v1576, %v1767
          %1786 = vset.pattern.permute.xlu0 0
          %1787 = vperm.xlu0 %1786, %v1745
          %v1788 = vpop.permute.xlu0 %1787
          %1791 = vset.pattern.permute.xlu0 0
          %1792 = vperm.xlu0 %1791, %v1746
          %v1793 = vpop.permute.xlu0 %1792
          %1796 = vset.pattern.permute.xlu0 0
          %1797 = vperm.xlu0 %1796, %v1747
          %v1798 = vpop.permute.xlu0 %1797
          %1801 = vset.pattern.permute.xlu0 0
          %1802 = vperm.xlu0 %1801, %v1748
          %v1803 = vpop.permute.xlu0 %1802
          %v1805 = vadd.f32 %v1769, %v1788
          %v1806 = vadd.f32 %v1770, %v1788
          %v1807 = vadd.f32 %v1771, %v1793
          %v1808 = vadd.f32 %v1772, %v1793
          %v1809 = vadd.f32 %v1773, %v1798
          %v1810 = vadd.f32 %v1774, %v1798
          %v1811 = vadd.f32 %v1775, %v1803
          %v1812 = vadd.f32 %v1776, %v1803
          %v1813 = vadd.f32 %v1777, %v1788
          %v1814 = vadd.f32 %v1778, %v1788
          %v1815 = vadd.f32 %v1779, %v1793
          %v1816 = vadd.f32 %v1780, %v1793
          %v1817 = vadd.f32 %v1781, %v1798
          %v1818 = vadd.f32 %v1782, %v1798
          %v1819 = vadd.f32 %v1783, %v1803
          %v1820 = vadd.f32 %v1784, %v1803
          %v1821 = vmax.f32 %v1805, 0.0
          %v1822 = vmax.f32 %v1806, 0.0
          %v1823 = vmax.f32 %v1807, 0.0
          %v1824 = vmax.f32 %v1808, 0.0
          %v1825 = vmax.f32 %v1809, 0.0
          %v1826 = vmax.f32 %v1810, 0.0
          %v1827 = vmax.f32 %v1811, 0.0
          %v1828 = vmax.f32 %v1812, 0.0
          %v1829 = vmax.f32 %v1813, 0.0
          %v1830 = vmax.f32 %v1814, 0.0
          %v1831 = vmax.f32 %v1815, 0.0
          %v1832 = vmax.f32 %v1816, 0.0
          %v1833 = vmax.f32 %v1817, 0.0
          %v1834 = vmax.f32 %v1818, 0.0
          %v1835 = vmax.f32 %v1819, 0.0
          %v1836 = vmax.f32 %v1820, 0.0
          %v1837 = vld [vmem:[%s4] sm:$0xff]
          %v1838 = vld [vmem:[%s4 + $0x8] sm:$0xff]
          %v1839 = vld [vmem:[%s4 + $0x10] sm:$0xff]
          %v1840 = vld [vmem:[%s4 + $0x18] sm:$0xff]
          %v1841 = vld [vmem:[%s5] sm:$0x3]
          %v1842 = vld [vmem:[%s6] sm:$0xff]
          %v1843 = vld [vmem:[%s6 + $0x8] sm:$0xff]
          %v1844 = vld [vmem:[%s6 + $0x10] sm:$0xff]
          %v1845 = vld [vmem:[%s6 + $0x18] sm:$0xff]
          %v1846 = vld [vmem:[%s7] sm:$0x3]
          %vm1847 = vcmask 261120
          %v1849 = vsel %vm1847, %v1837, 0
          %v1852 = vsel %vm1847, %v1838, 0
          %v1855 = vsel %vm1847, %v1839, 0
          %v1858 = vsel %vm1847, %v1840, 0
          %1860 = vmatprep.subr.mxu0 0.0
          %1861 = vmatpush1.msra.mxu0 0.0
          %1862 = vmatprep.subr.mxu0 0.0
          %1863 = vmatpush1.msra.mxu0 0.0
          %1864 = vmatprep.subr.mxu0 0.0
          %1865 = vmatpush1.msra.mxu0 0.0
          %1866 = vmatprep.subr.mxu0 0.0
          %1867 = vmatpush1.msra.mxu0 0.0
          %1868 = vmatprep.subr.mxu0 0.0
          %1869 = vmatpush1.msra.mxu0 0.0
          %1870 = vmatprep.subr.mxu0 0.0
          %1871 = vmatpush1.msra.mxu0 0.0
          %1872 = vmatprep.subr.mxu0 0.0
          %1873 = vmatpush1.msra.mxu0 0.0
          %1874 = vmatprep.subr.mxu0 0.0
          %1875 = vmatpush1.msra.mxu0 0.0
          %1876 = vmatprep.subr.mxu0 0.0
          %1877 = vmatpush1.msra.mxu0 0.0
          %1878 = vmatprep.subr.mxu0 0.0
          %1879 = vmatpush1.msra.mxu0 0.0
          %1880 = vmatprep.subr.mxu0 0.0
          %1881 = vmatpush1.msra.mxu0 0.0
          %1882 = vmatprep.subr.mxu0 0.0
          %1883 = vmatpush1.msra.mxu0 0.0
          %1884 = vmatprep.subr.mxu0 %v1828
          %1885 = vmatpush1.msra.mxu0 %v1827
          %1886 = vmatprep.subr.mxu0 %v1826
          %1887 = vmatpush1.msra.mxu0 %v1825
          %1888 = vmatprep.subr.mxu0 %v1824
          %1889 = vmatpush1.msra.mxu0 %v1823
          %1890 = vmatprep.subr.mxu0 %v1822
          %1891 = vmatpush1.msra.mxu0 %v1821
          %1892 = vmatprep.subr.mxu0 0.0
          %1893 = vmatpush2.msra.mxu0 0.0
          %1894 = vmatprep.subr.mxu0 0.0
          %1895 = vmatpush2.msra.mxu0 0.0
          %1896 = vmatprep.subr.mxu0 0.0
          %1897 = vmatpush2.msra.mxu0 0.0
          %1898 = vmatprep.subr.mxu0 0.0
          %1899 = vmatpush2.msra.mxu0 0.0
          %1900 = vmatprep.subr.mxu0 0.0
          %1901 = vmatpush2.msra.mxu0 0.0
          %1902 = vmatprep.subr.mxu0 0.0
          %1903 = vmatpush2.msra.mxu0 0.0
          %1904 = vmatprep.subr.mxu0 0.0
          %1905 = vmatpush2.msra.mxu0 0.0
          %1906 = vmatprep.subr.mxu0 0.0
          %1907 = vmatpush2.msra.mxu0 0.0
          %1908 = vmatprep.subr.mxu0 0.0
          %1909 = vmatpush2.msra.mxu0 0.0
          %1910 = vmatprep.subr.mxu0 0.0
          %1911 = vmatpush2.msra.mxu0 0.0
          %1912 = vmatprep.subr.mxu0 0.0
          %1913 = vmatpush2.msra.mxu0 0.0
          %1914 = vmatprep.subr.mxu0 0.0
          %1915 = vmatpush2.msra.mxu0 0.0
          %1916 = vmatprep.subr.mxu0 0.0
          %1917 = vmatpush2.msra.mxu0 0.0
          %1918 = vmatprep.subr.mxu0 0.0
          %1919 = vmatpush2.msra.mxu0 0.0
          %1920 = vmatprep.subr.mxu0 0.0
          %1921 = vmatpush2.msra.mxu0 0.0
          %1922 = vmatprep.subr.mxu0 0.0
          %1923 = vmatpush2.msra.mxu0 0.0
          %1924 = vmatprep.mubr.f32.mxu0 0.0
          %1925 = vmatmul.mubr.f32.gmra.mxu0 %v1849
          %v1926 = vpop.f32.mrf.mxu0
          %v1927 = vadd.f32 %v325, %v1926
          %v1928 = vpop.f32.mrf.mxu0
          %v1929 = vadd.f32 %v326, %v1928
          %1930 = vmatprep.mubr.f32.mxu0 0.0
          %1931 = vmatmul.mubr.f32.gmra.mxu0 %v1852
          %v1932 = vpop.f32.mrf.mxu0
          %v1933 = vadd.f32 %v327, %v1932
          %v1934 = vpop.f32.mrf.mxu0
          %v1935 = vadd.f32 %v328, %v1934
          %1936 = vmatprep.mubr.f32.mxu0 0.0
          %1937 = vmatmul.mubr.f32.gmra.mxu0 %v1855
          %v1938 = vpop.f32.mrf.mxu0
          %v1939 = vadd.f32 %v329, %v1938
          %v1940 = vpop.f32.mrf.mxu0
          %v1941 = vadd.f32 %v330, %v1940
          %1942 = vmatprep.mubr.f32.mxu0 0.0
          %1943 = vmatmul.mubr.f32.gmra.mxu0 %v1858
          %v1944 = vpop.f32.mrf.mxu0
          %v1945 = vadd.f32 %v331, %v1944
          %v1946 = vpop.f32.mrf.mxu0
          %v1947 = vadd.f32 %v332, %v1946
          %1948 = vdwg.mxu0
          %v1949 = vadd.f32 %v1927, %v1929
          %1950 = vadd.xlane.f32.xlu0 %v1949
          %v1951 = vpop.xlane.xlu0 %1950
          %v1952 = vadd.f32 %v1933, %v1935
          %1953 = vadd.xlane.f32.xlu0 %v1952
          %v1954 = vpop.xlane.xlu0 %1953
          %v1955 = vadd.f32 %v1939, %v1941
          %1956 = vadd.xlane.f32.xlu0 %v1955
          %v1957 = vpop.xlane.xlu0 %1956
          %v1958 = vadd.f32 %v1945, %v1947
          %1959 = vadd.xlane.f32.xlu0 %v1958
          %v1960 = vpop.xlane.xlu0 %1959
          %v1961 = vrcp.pop 256.0
          %v1962 = vmul.f32 %v1951, %v1961
          %v1963 = vmul.f32 %v1954, %v1961
          %v1964 = vmul.f32 %v1957, %v1961
          %v1965 = vmul.f32 %v1960, %v1961
          %v1966 = vmax.f32 %v1927, %v1929
          %1967 = vmax.xlane.f32.xlu0 %v1966
          %v1968 = vpop.xlane.xlu0 %1967
          %v1969 = vmax.f32 %v1933, %v1935
          %1970 = vmax.xlane.f32.xlu0 %v1969
          %v1971 = vpop.xlane.xlu0 %1970
          %v1972 = vmax.f32 %v1939, %v1941
          %1973 = vmax.xlane.f32.xlu0 %v1972
          %v1974 = vpop.xlane.xlu0 %1973
          %v1975 = vmax.f32 %v1945, %v1947
          %1976 = vmax.xlane.f32.xlu0 %v1975
          %v1977 = vpop.xlane.xlu0 %1976
          %v1978 = vsel %vm922, %v1962, %v1968
          %v1979 = vsel %vm922, %v1963, %v1971
          %v1980 = vsel %vm922, %v1964, %v1974
          %v1981 = vsel %vm922, %v1965, %v1977
          %v1983 = vsel %vm1847, %v1841, 0
          %1985 = vmatprep.subr.mxu0 0.0
          %1986 = vmatpush1.msra.mxu0 0.0
          %1987 = vmatprep.subr.mxu0 0.0
          %1988 = vmatpush1.msra.mxu0 0.0
          %1989 = vmatprep.subr.mxu0 0.0
          %1990 = vmatpush1.msra.mxu0 0.0
          %1991 = vmatprep.subr.mxu0 0.0
          %1992 = vmatpush1.msra.mxu0 0.0
          %1993 = vmatprep.subr.mxu0 0.0
          %1994 = vmatpush1.msra.mxu0 0.0
          %1995 = vmatprep.subr.mxu0 0.0
          %1996 = vmatpush1.msra.mxu0 0.0
          %1997 = vmatprep.subr.mxu0 0.0
          %1998 = vmatpush1.msra.mxu0 0.0
          %1999 = vmatprep.subr.mxu0 0.0
          %2000 = vmatpush1.msra.mxu0 0.0
          %2001 = vmatprep.subr.mxu0 0.0
          %2002 = vmatpush1.msra.mxu0 0.0
          %2003 = vmatprep.subr.mxu0 0.0
          %2004 = vmatpush1.msra.mxu0 0.0
          %2005 = vmatprep.subr.mxu0 0.0
          %2006 = vmatpush1.msra.mxu0 0.0
          %2007 = vmatprep.subr.mxu0 0.0
          %2008 = vmatpush1.msra.mxu0 0.0
          %2009 = vmatprep.subr.mxu0 0.0
          %2010 = vmatpush1.msra.mxu0 %v1981
          %2011 = vmatprep.subr.mxu0 0.0
          %2012 = vmatpush1.msra.mxu0 %v1980
          %2013 = vmatprep.subr.mxu0 0.0
          %2014 = vmatpush1.msra.mxu0 %v1979
          %2015 = vmatprep.subr.mxu0 0.0
          %2016 = vmatpush1.msra.mxu0 %v1978
          %2017 = vmatprep.subr.mxu0 0.0
          %2018 = vmatpush2.msra.mxu0 0.0
          %2019 = vmatprep.subr.mxu0 0.0
          %2020 = vmatpush2.msra.mxu0 0.0
          %2021 = vmatprep.subr.mxu0 0.0
          %2022 = vmatpush2.msra.mxu0 0.0
          %2023 = vmatprep.subr.mxu0 0.0
          %2024 = vmatpush2.msra.mxu0 0.0
          %2025 = vmatprep.subr.mxu0 0.0
          %2026 = vmatpush2.msra.mxu0 0.0
          %2027 = vmatprep.subr.mxu0 0.0
          %2028 = vmatpush2.msra.mxu0 0.0
          %2029 = vmatprep.subr.mxu0 0.0
          %2030 = vmatpush2.msra.mxu0 0.0
          %2031 = vmatprep.subr.mxu0 0.0
          %2032 = vmatpush2.msra.mxu0 0.0
          %2033 = vmatprep.subr.mxu0 0.0
          %2034 = vmatpush2.msra.mxu0 0.0
          %2035 = vmatprep.subr.mxu0 0.0
          %2036 = vmatpush2.msra.mxu0 0.0
          %2037 = vmatprep.subr.mxu0 0.0
          %2038 = vmatpush2.msra.mxu0 0.0
          %2039 = vmatprep.subr.mxu0 0.0
          %2040 = vmatpush2.msra.mxu0 0.0
          %2041 = vmatprep.subr.mxu0 0.0
          %2042 = vmatpush2.msra.mxu0 0.0
          %2043 = vmatprep.subr.mxu0 0.0
          %2044 = vmatpush2.msra.mxu0 0.0
          %2045 = vmatprep.subr.mxu0 0.0
          %2046 = vmatpush2.msra.mxu0 0.0
          %2047 = vmatprep.subr.mxu0 0.0
          %2048 = vmatpush2.msra.mxu0 0.0
          %2049 = vmatprep.mubr.f32.mxu0 0.0
          %2050 = vmatmul.mubr.f32.gmra.mxu0 %v1983
          %v2051 = vpop.f32.mrf.mxu0
          %v2052 = vadd.f32 0.0, %v2051
          %v2053 = vpop.f32.mrf.mxu0
          %2054 = vdwg.mxu0
          %v2055 = vmax.f32 %v2052, 0.0
          %vm2056 = vcmask 15360
          %v2058 = vsel %vm2056, %v1842, 0
          %v2061 = vsel %vm2056, %v1843, 0
          %v2064 = vsel %vm2056, %v1844, 0
          %v2067 = vsel %vm2056, %v1845, 0
          %vm2069 = vcmask 1041408
          %v2071 = vsel %vm2069, %v2055, 0
          %2073 = vmatprep.subr.mxu0 0.0
          %2074 = vmatpush1.msra.mxu0 0.0
          %2075 = vmatprep.subr.mxu0 0.0
          %2076 = vmatpush1.msra.mxu0 0.0
          %2077 = vmatprep.subr.mxu0 0.0
          %2078 = vmatpush1.msra.mxu0 0.0
          %2079 = vmatprep.subr.mxu0 0.0
          %2080 = vmatpush1.msra.mxu0 0.0
          %2081 = vmatprep.subr.mxu0 0.0
          %2082 = vmatpush1.msra.mxu0 0.0
          %2083 = vmatprep.subr.mxu0 0.0
          %2084 = vmatpush1.msra.mxu0 0.0
          %2085 = vmatprep.subr.mxu0 0.0
          %2086 = vmatpush1.msra.mxu0 0.0
          %2087 = vmatprep.subr.mxu0 0.0
          %2088 = vmatpush1.msra.mxu0 0.0
          %2089 = vmatprep.subr.mxu0 0.0
          %2090 = vmatpush1.msra.mxu0 0.0
          %2091 = vmatprep.subr.mxu0 0.0
          %2092 = vmatpush1.msra.mxu0 0.0
          %2093 = vmatprep.subr.mxu0 0.0
          %2094 = vmatpush1.msra.mxu0 0.0
          %2095 = vmatprep.subr.mxu0 0.0
          %2096 = vmatpush1.msra.mxu0 0.0
          %2097 = vmatprep.subr.mxu0 0.0
          %2098 = vmatpush1.msra.mxu0 0.0
          %2099 = vmatprep.subr.mxu0 0.0
          %2100 = vmatpush1.msra.mxu0 0.0
          %2101 = vmatprep.subr.mxu0 0.0
          %2102 = vmatpush1.msra.mxu0 0.0
          %2103 = vmatprep.subr.mxu0 0.0
          %2104 = vmatpush1.msra.mxu0 %v2071
          %2105 = vmatprep.subr.mxu0 0.0
          %2106 = vmatpush2.msra.mxu0 0.0
          %2107 = vmatprep.subr.mxu0 0.0
          %2108 = vmatpush2.msra.mxu0 0.0
          %2109 = vmatprep.subr.mxu0 0.0
          %2110 = vmatpush2.msra.mxu0 0.0
          %2111 = vmatprep.subr.mxu0 0.0
          %2112 = vmatpush2.msra.mxu0 0.0
          %2113 = vmatprep.subr.mxu0 0.0
          %2114 = vmatpush2.msra.mxu0 0.0
          %2115 = vmatprep.subr.mxu0 0.0
          %2116 = vmatpush2.msra.mxu0 0.0
          %2117 = vmatprep.subr.mxu0 0.0
          %2118 = vmatpush2.msra.mxu0 0.0
          %2119 = vmatprep.subr.mxu0 0.0
          %2120 = vmatpush2.msra.mxu0 0.0
          %2121 = vmatprep.subr.mxu0 0.0
          %2122 = vmatpush2.msra.mxu0 0.0
          %2123 = vmatprep.subr.mxu0 0.0
          %2124 = vmatpush2.msra.mxu0 0.0
          %2125 = vmatprep.subr.mxu0 0.0
          %2126 = vmatpush2.msra.mxu0 0.0
          %2127 = vmatprep.subr.mxu0 0.0
          %2128 = vmatpush2.msra.mxu0 0.0
          %2129 = vmatprep.subr.mxu0 0.0
          %2130 = vmatpush2.msra.mxu0 0.0
          %2131 = vmatprep.subr.mxu0 0.0
          %2132 = vmatpush2.msra.mxu0 0.0
          %2133 = vmatprep.subr.mxu0 0.0
          %2134 = vmatpush2.msra.mxu0 0.0
          %2135 = vmatprep.subr.mxu0 0.0
          %2136 = vmatpush2.msra.mxu0 0.0
          %2137 = vmatprep.mubr.f32.mxu0 0.0
          %2138 = vmatmul.mubr.f32.gmra.mxu0 %v2058
          %v2139 = vpop.f32.mrf.mxu0
          %v2140 = vadd.f32 0.0, %v2139
          %v2141 = vpop.f32.mrf.mxu0
          %2142 = vmatprep.mubr.f32.mxu0 0.0
          %2143 = vmatmul.mubr.f32.gmra.mxu0 %v2061
          %v2144 = vpop.f32.mrf.mxu0
          %v2145 = vadd.f32 0.0, %v2144
          %v2146 = vpop.f32.mrf.mxu0
          %2147 = vmatprep.mubr.f32.mxu0 0.0
          %2148 = vmatmul.mubr.f32.gmra.mxu0 %v2064
          %v2149 = vpop.f32.mrf.mxu0
          %v2150 = vadd.f32 0.0, %v2149
          %v2151 = vpop.f32.mrf.mxu0
          %2152 = vmatprep.mubr.f32.mxu0 0.0
          %2153 = vmatmul.mubr.f32.gmra.mxu0 %v2067
          %v2154 = vpop.f32.mrf.mxu0
          %v2155 = vadd.f32 0.0, %v2154
          %v2156 = vpop.f32.mrf.mxu0
          %2157 = vdwg.mxu0
          %2162 = vrot.lane.b32.xlu0 %v2140, 127
          %v2163 = vpop.permute.xlu0 %2162
          %2164 = vrot.lane.b32.xlu0 %v2145, 127
          %v2165 = vpop.permute.xlu0 %2164
          %2166 = vrot.lane.b32.xlu0 %v2150, 127
          %v2167 = vpop.permute.xlu0 %2166
          %2168 = vrot.lane.b32.xlu0 %v2155, 127
          %v2169 = vpop.permute.xlu0 %2168
          %v2174 = vadd.f32 %v2140, %v2163
          %v2175 = vadd.f32 %v2145, %v2165
          %v2176 = vadd.f32 %v2150, %v2167
          %v2177 = vadd.f32 %v2155, %v2169
          %v2178 = vxor.u32 %v2174, 2147483648
          %v2179 = vxor.u32 %v2175, 2147483648
          %v2180 = vxor.u32 %v2176, 2147483648
          %v2181 = vxor.u32 %v2177, 2147483648
          %v2182 = vmul.f32 %v2178, 1.442695
          %v2183 = vpow.pop %v2182
          %v2184 = vmul.f32 %v2179, 1.442695
          %v2185 = vpow.pop %v2184
          %v2186 = vmul.f32 %v2180, 1.442695
          %v2187 = vpow.pop %v2186
          %v2188 = vmul.f32 %v2181, 1.442695
          %v2189 = vpow.pop %v2188
          %v2190 = vadd.f32 %v2183, 1.0
          %v2191 = vadd.f32 %v2185, 1.0
          %v2192 = vadd.f32 %v2187, 1.0
          %v2193 = vadd.f32 %v2189, 1.0
          %v2194 = vrcp.pop %v2190
          %v2195 = vmul.f32 1.0, %v2194
          %v2196 = vrcp.pop %v2191
          %v2197 = vmul.f32 1.0, %v2196
          %v2198 = vrcp.pop %v2192
          %v2199 = vmul.f32 1.0, %v2198
          %v2200 = vrcp.pop %v2193
          %v2201 = vmul.f32 1.0, %v2200
          %v2202 = vsel %vm922, %v2195, 0.0
          %v2203 = vsel %vm922, %v2197, 0.0
          %v2204 = vadd.f32 %v2202, %v2203
          %v2205 = vsel %vm922, %v2199, 0.0
          %v2206 = vadd.f32 %v2204, %v2205
          %v2207 = vsel %vm922, %v2201, 0.0
          %v2208 = vadd.f32 %v2206, %v2207
          %v2209 = vrot.slane %v2208, 4
          %v2210 = vadd.f32 %v2208, %v2209
          %v2211 = vrot.slane %v2210, 2
          %v2212 = vadd.f32 %v2210, %v2211
          %v2213 = vrot.slane %v2212, 1
          %v2214 = vadd.f32 %v2212, %v2213
          %v2215 = vrcp.pop 32.0
          %v2216 = vmul.f32 %v2214, %v2215
          %v2217 = vsel %vm922, %v2195, -inf
          %v2218 = vsel %vm922, %v2197, -inf
          %v2219 = vsel %vm922, %v2199, -inf
          %v2220 = vsel %vm922, %v2201, -inf
          %v2221 = vmax.f32 %v2217, %v2218
          %v2222 = vmax.f32 %v2219, %v2220
          %v2223 = vmax.f32 %v2221, %v2222
          %v2224 = vrot.slane %v2223, 4
          %v2225 = vmax.f32 %v2223, %v2224
          %v2226 = vrot.slane %v2225, 2
          %v2227 = vmax.f32 %v2225, %v2226
          %v2228 = vrot.slane %v2227, 1
          %v2229 = vmax.f32 %v2227, %v2228
          %vm2230 = vcmask 1040384
          %v2231 = vsel %vm2230, %v2216, %v2229
          %v2232 = vmul.f32 %v2231, %v1846
          %vm2233 = vcmask 1024
          %v2234 = vsel %vm2233, %v2232, 0.0
          %v2235 = vrot.slane %v2234, 4
          %v2236 = vadd.f32 %v2234, %v2235
          %v2237 = vrot.slane %v2236, 2
          %v2238 = vadd.f32 %v2236, %v2237
          %v2239 = vrot.slane %v2238, 1
          %v2240 = vadd.f32 %v2238, %v2239
          %v2241 = vxor.u32 %v2240, 2147483648
          %v2242 = vmul.f32 %v2241, 1.442695
          %v2243 = vpow.pop %v2242
          %v2244 = vadd.f32 %v2243, 1.0
          %v2245 = vrcp.pop %v2244
          %v2246 = vmul.f32 1.0, %v2245
          %2248 = vset.pattern.permute.xlu0 0
          %2249 = vperm.xlu0 %2248, %v2246
          %v2250 = vpop.permute.xlu0 %2249
          %v2252 = vadd.f32 %v1927, %v2250
          %v2253 = vadd.f32 %v1929, %v2250
          %v2254 = vadd.f32 %v1933, %v2250
          %v2255 = vadd.f32 %v1935, %v2250
          %v2256 = vadd.f32 %v1939, %v2250
          %v2257 = vadd.f32 %v1941, %v2250
          %v2258 = vadd.f32 %v1945, %v2250
          %v2259 = vadd.f32 %v1947, %v2250
          %2260 = vst [vmem:[%s315] sm:$0xff] %v2252
          %2261 = vst [vmem:[%s315 + $0x8] sm:$0xff] %v2253
          %2262 = vst [vmem:[%s315 + $0x10] sm:$0xff] %v2254
          %2263 = vst [vmem:[%s315 + $0x18] sm:$0xff] %v2255
          %2264 = vst [vmem:[%s315 + $0x20] sm:$0xff] %v2256
          %2265 = vst [vmem:[%s315 + $0x28] sm:$0xff] %v2257
          %2266 = vst [vmem:[%s315 + $0x30] sm:$0xff] %v2258
          %2267 = vst [vmem:[%s315 + $0x38] sm:$0xff] %v2259
          %2268 = vmatprep.subr.mxu0 0.0
          %2269 = vmatpush1.msra.mxu0 0.0
          %2270 = vmatprep.subr.mxu0 0.0
          %2271 = vmatpush1.msra.mxu0 0.0
          %2272 = vmatprep.subr.mxu0 0.0
          %2273 = vmatpush1.msra.mxu0 0.0
          %2274 = vmatprep.subr.mxu0 0.0
          %2275 = vmatpush1.msra.mxu0 0.0
          %2276 = vmatprep.subr.mxu0 0.0
          %2277 = vmatpush1.msra.mxu0 0.0
          %2278 = vmatprep.subr.mxu0 0.0
          %2279 = vmatpush1.msra.mxu0 0.0
          %2280 = vmatprep.subr.mxu0 0.0
          %2281 = vmatpush1.msra.mxu0 0.0
          %2282 = vmatprep.subr.mxu0 0.0
          %2283 = vmatpush1.msra.mxu0 0.0
          %2284 = vmatprep.subr.mxu0 0.0
          %2285 = vmatpush1.msra.mxu0 0.0
          %2286 = vmatprep.subr.mxu0 0.0
          %2287 = vmatpush1.msra.mxu0 0.0
          %2288 = vmatprep.subr.mxu0 0.0
          %2289 = vmatpush1.msra.mxu0 0.0
          %2290 = vmatprep.subr.mxu0 0.0
          %2291 = vmatpush1.msra.mxu0 0.0
          %2292 = vmatprep.subr.mxu0 %v1836
          %2293 = vmatpush1.msra.mxu0 %v1835
          %2294 = vmatprep.subr.mxu0 %v1834
          %2295 = vmatpush1.msra.mxu0 %v1833
          %2296 = vmatprep.subr.mxu0 %v1832
          %2297 = vmatpush1.msra.mxu0 %v1831
          %2298 = vmatprep.subr.mxu0 %v1830
          %2299 = vmatpush1.msra.mxu0 %v1829
          %2300 = vmatprep.subr.mxu0 0.0
          %2301 = vmatpush2.msra.mxu0 0.0
          %2302 = vmatprep.subr.mxu0 0.0
          %2303 = vmatpush2.msra.mxu0 0.0
          %2304 = vmatprep.subr.mxu0 0.0
          %2305 = vmatpush2.msra.mxu0 0.0
          %2306 = vmatprep.subr.mxu0 0.0
          %2307 = vmatpush2.msra.mxu0 0.0
          %2308 = vmatprep.subr.mxu0 0.0
          %2309 = vmatpush2.msra.mxu0 0.0
          %2310 = vmatprep.subr.mxu0 0.0
          %2311 = vmatpush2.msra.mxu0 0.0
          %2312 = vmatprep.subr.mxu0 0.0
          %2313 = vmatpush2.msra.mxu0 0.0
          %2314 = vmatprep.subr.mxu0 0.0
          %2315 = vmatpush2.msra.mxu0 0.0
          %2316 = vmatprep.subr.mxu0 0.0
          %2317 = vmatpush2.msra.mxu0 0.0
          %2318 = vmatprep.subr.mxu0 0.0
          %2319 = vmatpush2.msra.mxu0 0.0
          %2320 = vmatprep.subr.mxu0 0.0
          %2321 = vmatpush2.msra.mxu0 0.0
          %2322 = vmatprep.subr.mxu0 0.0
          %2323 = vmatpush2.msra.mxu0 0.0
          %2324 = vmatprep.subr.mxu0 0.0
          %2325 = vmatpush2.msra.mxu0 0.0
          %2326 = vmatprep.subr.mxu0 0.0
          %2327 = vmatpush2.msra.mxu0 0.0
          %2328 = vmatprep.subr.mxu0 0.0
          %2329 = vmatpush2.msra.mxu0 0.0
          %2330 = vmatprep.subr.mxu0 0.0
          %2331 = vmatpush2.msra.mxu0 0.0
          %2332 = vmatprep.mubr.f32.mxu0 0.0
          %2333 = vmatmul.mubr.f32.gmra.mxu0 %v1849
          %v2334 = vpop.f32.mrf.mxu0
          %v2335 = vadd.f32 %v333, %v2334
          %v2336 = vpop.f32.mrf.mxu0
          %v2337 = vadd.f32 %v334, %v2336
          %2338 = vmatprep.mubr.f32.mxu0 0.0
          %2339 = vmatmul.mubr.f32.gmra.mxu0 %v1852
          %v2340 = vpop.f32.mrf.mxu0
          %v2341 = vadd.f32 %v335, %v2340
          %v2342 = vpop.f32.mrf.mxu0
          %v2343 = vadd.f32 %v336, %v2342
          %2344 = vmatprep.mubr.f32.mxu0 0.0
          %2345 = vmatmul.mubr.f32.gmra.mxu0 %v1855
          %v2346 = vpop.f32.mrf.mxu0
          %v2347 = vadd.f32 %v337, %v2346
          %v2348 = vpop.f32.mrf.mxu0
          %v2349 = vadd.f32 %v338, %v2348
          %2350 = vmatprep.mubr.f32.mxu0 0.0
          %2351 = vmatmul.mubr.f32.gmra.mxu0 %v1858
          %v2352 = vpop.f32.mrf.mxu0
          %v2353 = vadd.f32 %v339, %v2352
          %v2354 = vpop.f32.mrf.mxu0
          %v2355 = vadd.f32 %v340, %v2354
          %2356 = vdwg.mxu0
          %v2357 = vadd.f32 %v2335, %v2337
          %2358 = vadd.xlane.f32.xlu0 %v2357
          %v2359 = vpop.xlane.xlu0 %2358
          %v2360 = vadd.f32 %v2341, %v2343
          %2361 = vadd.xlane.f32.xlu0 %v2360
          %v2362 = vpop.xlane.xlu0 %2361
          %v2363 = vadd.f32 %v2347, %v2349
          %2364 = vadd.xlane.f32.xlu0 %v2363
          %v2365 = vpop.xlane.xlu0 %2364
          %v2366 = vadd.f32 %v2353, %v2355
          %2367 = vadd.xlane.f32.xlu0 %v2366
          %v2368 = vpop.xlane.xlu0 %2367
          %v2369 = vmul.f32 %v2359, %v1961
          %v2370 = vmul.f32 %v2362, %v1961
          %v2371 = vmul.f32 %v2365, %v1961
          %v2372 = vmul.f32 %v2368, %v1961
          %v2373 = vmax.f32 %v2335, %v2337
          %2374 = vmax.xlane.f32.xlu0 %v2373
          %v2375 = vpop.xlane.xlu0 %2374
          %v2376 = vmax.f32 %v2341, %v2343
          %2377 = vmax.xlane.f32.xlu0 %v2376
          %v2378 = vpop.xlane.xlu0 %2377
          %v2379 = vmax.f32 %v2347, %v2349
          %2380 = vmax.xlane.f32.xlu0 %v2379
          %v2381 = vpop.xlane.xlu0 %2380
          %v2382 = vmax.f32 %v2353, %v2355
          %2383 = vmax.xlane.f32.xlu0 %v2382
          %v2384 = vpop.xlane.xlu0 %2383
          %v2385 = vsel %vm922, %v2369, %v2375
          %v2386 = vsel %vm922, %v2370, %v2378
          %v2387 = vsel %vm922, %v2371, %v2381
          %v2388 = vsel %vm922, %v2372, %v2384
          %2389 = vmatprep.subr.mxu0 0.0
          %2390 = vmatpush1.msra.mxu0 0.0
          %2391 = vmatprep.subr.mxu0 0.0
          %2392 = vmatpush1.msra.mxu0 0.0
          %2393 = vmatprep.subr.mxu0 0.0
          %2394 = vmatpush1.msra.mxu0 0.0
          %2395 = vmatprep.subr.mxu0 0.0
          %2396 = vmatpush1.msra.mxu0 0.0
          %2397 = vmatprep.subr.mxu0 0.0
          %2398 = vmatpush1.msra.mxu0 0.0
          %2399 = vmatprep.subr.mxu0 0.0
          %2400 = vmatpush1.msra.mxu0 0.0
          %2401 = vmatprep.subr.mxu0 0.0
          %2402 = vmatpush1.msra.mxu0 0.0
          %2403 = vmatprep.subr.mxu0 0.0
          %2404 = vmatpush1.msra.mxu0 0.0
          %2405 = vmatprep.subr.mxu0 0.0
          %2406 = vmatpush1.msra.mxu0 0.0
          %2407 = vmatprep.subr.mxu0 0.0
          %2408 = vmatpush1.msra.mxu0 0.0
          %2409 = vmatprep.subr.mxu0 0.0
          %2410 = vmatpush1.msra.mxu0 0.0
          %2411 = vmatprep.subr.mxu0 0.0
          %2412 = vmatpush1.msra.mxu0 0.0
          %2413 = vmatprep.subr.mxu0 0.0
          %2414 = vmatpush1.msra.mxu0 %v2388
          %2415 = vmatprep.subr.mxu0 0.0
          %2416 = vmatpush1.msra.mxu0 %v2387
          %2417 = vmatprep.subr.mxu0 0.0
          %2418 = vmatpush1.msra.mxu0 %v2386
          %2419 = vmatprep.subr.mxu0 0.0
          %2420 = vmatpush1.msra.mxu0 %v2385
          %2421 = vmatprep.subr.mxu0 0.0
          %2422 = vmatpush2.msra.mxu0 0.0
          %2423 = vmatprep.subr.mxu0 0.0
          %2424 = vmatpush2.msra.mxu0 0.0
          %2425 = vmatprep.subr.mxu0 0.0
          %2426 = vmatpush2.msra.mxu0 0.0
          %2427 = vmatprep.subr.mxu0 0.0
          %2428 = vmatpush2.msra.mxu0 0.0
          %2429 = vmatprep.subr.mxu0 0.0
          %2430 = vmatpush2.msra.mxu0 0.0
          %2431 = vmatprep.subr.mxu0 0.0
          %2432 = vmatpush2.msra.mxu0 0.0
          %2433 = vmatprep.subr.mxu0 0.0
          %2434 = vmatpush2.msra.mxu0 0.0
          %2435 = vmatprep.subr.mxu0 0.0
          %2436 = vmatpush2.msra.mxu0 0.0
          %2437 = vmatprep.subr.mxu0 0.0
          %2438 = vmatpush2.msra.mxu0 0.0
          %2439 = vmatprep.subr.mxu0 0.0
          %2440 = vmatpush2.msra.mxu0 0.0
          %2441 = vmatprep.subr.mxu0 0.0
          %2442 = vmatpush2.msra.mxu0 0.0
          %2443 = vmatprep.subr.mxu0 0.0
          %2444 = vmatpush2.msra.mxu0 0.0
          %2445 = vmatprep.subr.mxu0 0.0
          %2446 = vmatpush2.msra.mxu0 0.0
          %2447 = vmatprep.subr.mxu0 0.0
          %2448 = vmatpush2.msra.mxu0 0.0
          %2449 = vmatprep.subr.mxu0 0.0
          %2450 = vmatpush2.msra.mxu0 0.0
          %2451 = vmatprep.subr.mxu0 0.0
          %2452 = vmatpush2.msra.mxu0 0.0
          %2453 = vmatprep.mubr.f32.mxu0 0.0
          %2454 = vmatmul.mubr.f32.gmra.mxu0 %v1983
          %v2455 = vpop.f32.mrf.mxu0
          %v2456 = vadd.f32 0.0, %v2455
          %v2457 = vpop.f32.mrf.mxu0
          %2458 = vdwg.mxu0
          %v2459 = vmax.f32 %v2456, 0.0
          %v2461 = vsel %vm2069, %v2459, 0
          %2463 = vmatprep.subr.mxu0 0.0
          %2464 = vmatpush1.msra.mxu0 0.0
          %2465 = vmatprep.subr.mxu0 0.0
          %2466 = vmatpush1.msra.mxu0 0.0
          %2467 = vmatprep.subr.mxu0 0.0
          %2468 = vmatpush1.msra.mxu0 0.0
          %2469 = vmatprep.subr.mxu0 0.0
          %2470 = vmatpush1.msra.mxu0 0.0
          %2471 = vmatprep.subr.mxu0 0.0
          %2472 = vmatpush1.msra.mxu0 0.0
          %2473 = vmatprep.subr.mxu0 0.0
          %2474 = vmatpush1.msra.mxu0 0.0
          %2475 = vmatprep.subr.mxu0 0.0
          %2476 = vmatpush1.msra.mxu0 0.0
          %2477 = vmatprep.subr.mxu0 0.0
          %2478 = vmatpush1.msra.mxu0 0.0
          %2479 = vmatprep.subr.mxu0 0.0
          %2480 = vmatpush1.msra.mxu0 0.0
          %2481 = vmatprep.subr.mxu0 0.0
          %2482 = vmatpush1.msra.mxu0 0.0
          %2483 = vmatprep.subr.mxu0 0.0
          %2484 = vmatpush1.msra.mxu0 0.0
          %2485 = vmatprep.subr.mxu0 0.0
          %2486 = vmatpush1.msra.mxu0 0.0
          %2487 = vmatprep.subr.mxu0 0.0
          %2488 = vmatpush1.msra.mxu0 0.0
          %2489 = vmatprep.subr.mxu0 0.0
          %2490 = vmatpush1.msra.mxu0 0.0
          %2491 = vmatprep.subr.mxu0 0.0
          %2492 = vmatpush1.msra.mxu0 0.0
          %2493 = vmatprep.subr.mxu0 0.0
          %2494 = vmatpush1.msra.mxu0 %v2461
          %2495 = vmatprep.subr.mxu0 0.0
          %2496 = vmatpush2.msra.mxu0 0.0
          %2497 = vmatprep.subr.mxu0 0.0
          %2498 = vmatpush2.msra.mxu0 0.0
          %2499 = vmatprep.subr.mxu0 0.0
          %2500 = vmatpush2.msra.mxu0 0.0
          %2501 = vmatprep.subr.mxu0 0.0
          %2502 = vmatpush2.msra.mxu0 0.0
          %2503 = vmatprep.subr.mxu0 0.0
          %2504 = vmatpush2.msra.mxu0 0.0
          %2505 = vmatprep.subr.mxu0 0.0
          %2506 = vmatpush2.msra.mxu0 0.0
          %2507 = vmatprep.subr.mxu0 0.0
          %2508 = vmatpush2.msra.mxu0 0.0
          %2509 = vmatprep.subr.mxu0 0.0
          %2510 = vmatpush2.msra.mxu0 0.0
          %2511 = vmatprep.subr.mxu0 0.0
          %2512 = vmatpush2.msra.mxu0 0.0
          %2513 = vmatprep.subr.mxu0 0.0
          %2514 = vmatpush2.msra.mxu0 0.0
          %2515 = vmatprep.subr.mxu0 0.0
          %2516 = vmatpush2.msra.mxu0 0.0
          %2517 = vmatprep.subr.mxu0 0.0
          %2518 = vmatpush2.msra.mxu0 0.0
          %2519 = vmatprep.subr.mxu0 0.0
          %2520 = vmatpush2.msra.mxu0 0.0
          %2521 = vmatprep.subr.mxu0 0.0
          %2522 = vmatpush2.msra.mxu0 0.0
          %2523 = vmatprep.subr.mxu0 0.0
          %2524 = vmatpush2.msra.mxu0 0.0
          %2525 = vmatprep.subr.mxu0 0.0
          %2526 = vmatpush2.msra.mxu0 0.0
          %2527 = vmatprep.mubr.f32.mxu0 0.0
          %2528 = vmatmul.mubr.f32.gmra.mxu0 %v2058
          %v2529 = vpop.f32.mrf.mxu0
          %v2530 = vadd.f32 0.0, %v2529
          %v2531 = vpop.f32.mrf.mxu0
          %2532 = vmatprep.mubr.f32.mxu0 0.0
          %2533 = vmatmul.mubr.f32.gmra.mxu0 %v2061
          %v2534 = vpop.f32.mrf.mxu0
          %v2535 = vadd.f32 0.0, %v2534
          %v2536 = vpop.f32.mrf.mxu0
          %2537 = vmatprep.mubr.f32.mxu0 0.0
          %2538 = vmatmul.mubr.f32.gmra.mxu0 %v2064
          %v2539 = vpop.f32.mrf.mxu0
          %v2540 = vadd.f32 0.0, %v2539
          %v2541 = vpop.f32.mrf.mxu0
          %2542 = vmatprep.mubr.f32.mxu0 0.0
          %2543 = vmatmul.mubr.f32.gmra.mxu0 %v2067
          %v2544 = vpop.f32.mrf.mxu0
          %v2545 = vadd.f32 0.0, %v2544
          %v2546 = vpop.f32.mrf.mxu0
          %2547 = vdwg.mxu0
          %2552 = vrot.lane.b32.xlu0 %v2530, 127
          %v2553 = vpop.permute.xlu0 %2552
          %2554 = vrot.lane.b32.xlu0 %v2535, 127
          %v2555 = vpop.permute.xlu0 %2554
          %2556 = vrot.lane.b32.xlu0 %v2540, 127
          %v2557 = vpop.permute.xlu0 %2556
          %2558 = vrot.lane.b32.xlu0 %v2545, 127
          %v2559 = vpop.permute.xlu0 %2558
          %v2564 = vadd.f32 %v2530, %v2553
          %v2565 = vadd.f32 %v2535, %v2555
          %v2566 = vadd.f32 %v2540, %v2557
          %v2567 = vadd.f32 %v2545, %v2559
          %v2568 = vxor.u32 %v2564, 2147483648
          %v2569 = vxor.u32 %v2565, 2147483648
          %v2570 = vxor.u32 %v2566, 2147483648
          %v2571 = vxor.u32 %v2567, 2147483648
          %v2572 = vmul.f32 %v2568, 1.442695
          %v2573 = vpow.pop %v2572
          %v2574 = vmul.f32 %v2569, 1.442695
          %v2575 = vpow.pop %v2574
          %v2576 = vmul.f32 %v2570, 1.442695
          %v2577 = vpow.pop %v2576
          %v2578 = vmul.f32 %v2571, 1.442695
          %v2579 = vpow.pop %v2578
          %v2580 = vadd.f32 %v2573, 1.0
          %v2581 = vadd.f32 %v2575, 1.0
          %v2582 = vadd.f32 %v2577, 1.0
          %v2583 = vadd.f32 %v2579, 1.0
          %v2584 = vrcp.pop %v2580
          %v2585 = vmul.f32 1.0, %v2584
          %v2586 = vrcp.pop %v2581
          %v2587 = vmul.f32 1.0, %v2586
          %v2588 = vrcp.pop %v2582
          %v2589 = vmul.f32 1.0, %v2588
          %v2590 = vrcp.pop %v2583
          %v2591 = vmul.f32 1.0, %v2590
          %v2592 = vsel %vm922, %v2585, 0.0
          %v2593 = vsel %vm922, %v2587, 0.0
          %v2594 = vadd.f32 %v2592, %v2593
          %v2595 = vsel %vm922, %v2589, 0.0
          %v2596 = vadd.f32 %v2594, %v2595
          %v2597 = vsel %vm922, %v2591, 0.0
          %v2598 = vadd.f32 %v2596, %v2597
          %v2599 = vrot.slane %v2598, 4
          %v2600 = vadd.f32 %v2598, %v2599
          %v2601 = vrot.slane %v2600, 2
          %v2602 = vadd.f32 %v2600, %v2601
          %v2603 = vrot.slane %v2602, 1
          %v2604 = vadd.f32 %v2602, %v2603
          %v2605 = vmul.f32 %v2604, %v2215
          %v2606 = vsel %vm922, %v2585, -inf
          %v2607 = vsel %vm922, %v2587, -inf
          %v2608 = vsel %vm922, %v2589, -inf
          %v2609 = vsel %vm922, %v2591, -inf
          %v2610 = vmax.f32 %v2606, %v2607
          %v2611 = vmax.f32 %v2608, %v2609
          %v2612 = vmax.f32 %v2610, %v2611
          %v2613 = vrot.slane %v2612, 4
          %v2614 = vmax.f32 %v2612, %v2613
          %v2615 = vrot.slane %v2614, 2
          %v2616 = vmax.f32 %v2614, %v2615
          %v2617 = vrot.slane %v2616, 1
          %v2618 = vmax.f32 %v2616, %v2617
          %v2619 = vsel %vm2230, %v2605, %v2618
          %v2620 = vmul.f32 %v2619, %v1846
          %v2621 = vsel %vm2233, %v2620, 0.0
          %v2622 = vrot.slane %v2621, 4
          %v2623 = vadd.f32 %v2621, %v2622
          %v2624 = vrot.slane %v2623, 2
          %v2625 = vadd.f32 %v2623, %v2624
          %v2626 = vrot.slane %v2625, 1
          %v2627 = vadd.f32 %v2625, %v2626
          %v2628 = vxor.u32 %v2627, 2147483648
          %v2629 = vmul.f32 %v2628, 1.442695
          %v2630 = vpow.pop %v2629
          %v2631 = vadd.f32 %v2630, 1.0
          %v2632 = vrcp.pop %v2631
          %v2633 = vmul.f32 1.0, %v2632
          %2635 = vset.pattern.permute.xlu0 0
          %2636 = vperm.xlu0 %2635, %v2633
          %v2637 = vpop.permute.xlu0 %2636
          %v2639 = vadd.f32 %v2335, %v2637
          %v2640 = vadd.f32 %v2337, %v2637
          %v2641 = vadd.f32 %v2341, %v2637
          %v2642 = vadd.f32 %v2343, %v2637
          %v2643 = vadd.f32 %v2347, %v2637
          %v2644 = vadd.f32 %v2349, %v2637
          %v2645 = vadd.f32 %v2353, %v2637
          %v2646 = vadd.f32 %v2355, %v2637
          %s2647 = scalar_lea.vmem %s315, 64 [#allocation4]
          %2648 = vst [vmem:[%s2647] sm:$0xff] %v2639
          %2649 = vst [vmem:[%s2647 + $0x8] sm:$0xff] %v2640
          %2650 = vst [vmem:[%s2647 + $0x10] sm:$0xff] %v2641
          %2651 = vst [vmem:[%s2647 + $0x18] sm:$0xff] %v2642
          %2652 = vst [vmem:[%s2647 + $0x20] sm:$0xff] %v2643
          %2653 = vst [vmem:[%s2647 + $0x28] sm:$0xff] %v2644
          %2654 = vst [vmem:[%s2647 + $0x30] sm:$0xff] %v2645
          %2655 = vst [vmem:[%s2647 + $0x38] sm:$0xff] %v2646
        $region64: #{tpu_custom_call.1} parent=51 // pred_fallthru
          _
        %s2656 = sand.u32 %s217, 1
        %s2657 = scalar_lea.sflag [#allocation5], %s2656
        %s2658 = sand.u32 %s217, 1
        %s2659 = smul.addr %s2658, 128
        %s2660 = scalar_lea.vmem [#allocation4], %s2659
        // Predicated region
        $region65: #{tpu_custom_call.1} parent=51 // pred_check
          %p2661 = pneg %p227
        $region66: #{tpu_custom_call.1} parent=51 // pred_check_branch
          %2663 = sbr.rel (%p2661) target = $region68
        $region67: #{tpu_custom_call.1} parent=51 // pred_region
          %s2664 = smul.u32 %s27, %s26
          %s2665 = smul.u32 2, %s2664
          %s2667 = ssub.s32 2048, 2048
          %2668 = vsyncadd %s2657, %s2667
          %s2669 = smul.addr %s2665, 8
          %s2670 = smul.addr %s2669, 128
          %s2671 = scalar_lea.hbm %s8, %s2670
          %s2672 = sshll.u32 %s2660, 4
          %s2673 = int_to_ptr.vmem [resolvable:$true] %s2672
          %2678 = dma.vmem_to_hbm [thread:$0]  %s2673, 2048, %s2671, %s2657, 256, 256, 16
        $region68: #{tpu_custom_call.1} parent=51 // pred_fallthru
          _
      $region52: #{tpu_custom_call.1} parent=5 // pred_fallthru
        _
      %p2679 = scmp.le.s32.totalorder 2, %s17
      // Predicated region
      $region69: #{tpu_custom_call.1} parent=5 // pred_check
        %p2680 = pneg %p2679
      $region70: #{tpu_custom_call.1} parent=5 // pred_check_branch
        %2682 = sbr.rel (%p2680) target = $region72
      $region71: #{tpu_custom_call.1} parent=5 // pred_region
        %s2683 = ssub.s32 %s17, 2
        // Predicated region
        $region73: #{tpu_custom_call.1} parent=71 // pred_check
          %p2684 = pneg %p233
        $region74: #{tpu_custom_call.1} parent=71 // pred_check_branch
          %2686 = sbr.rel (%p2684) target = $region76
        $region75: #{tpu_custom_call.1} parent=71 // pred_region
          %s2687 = sand.u32 %s218, 1
          %s2688 = scalar_lea.sflag [#allocation5], %s2687
          %s2689 = sand.u32 %s218, 1
          %s2690 = smul.addr %s2689, 128
          %s2691 = scalar_lea.vmem [#allocation4], %s2690
          %2692 = dma.done %s2688, 2048
        $region76: #{tpu_custom_call.1} parent=71 // pred_fallthru
          _
      $region72: #{tpu_custom_call.1} parent=5 // pred_fallthru
        _
    $region6: #{tpu_custom_call.1} parent=1 // loop_footer
      %s21 = sadd.s32 1, %s17
    $region7: #{tpu_custom_call.1} parent=1 // loop_footer_branch
      %16 = sbr.rel target = $region3
    $region8: #{tpu_custom_call.1} parent=1 // loop_exit
      _
    %2693 = vsyncpa [#allocation5], 1
    %s2694 = scalar_lea.sflag [#allocation5], 1
    %2695 = vsyncpa %s2694, 1

</llo_original>
